<compile_context>
chip_gen: v6e
topology: v6e:2x2x1
jax: 0.10.0
libtpu: 0.0.40
codegen_flags: <defaults>
</compile_context>

<pallas_src>
import functools

import jax
import jax.numpy as jnp
from jax.experimental import pallas as pl
from jax.experimental.pallas import tpu as pltpu

HIDDEN1 = 128
HIDDEN2 = 64


def _round_up(x, m):
    return (x + m - 1) // m * m


def _device_kind():
    try:
        return jax.devices()[0].device_kind.lower()
    except Exception:
        return ""


def _mlp_kernel(x_ref, w1_ref, b1_ref, w2_ref, b2_ref, w3_ref, b3_ref, o_ref,
                *, bf16_sigmoid):
    # fc1 + relu: cast x f32 -> bf16 on the VPU (hidden under the DMA pipeline),
    # accumulate in f32 on the MXU.
    x = x_ref[...].astype(jnp.bfloat16)
    h1 = jnp.dot(x, w1_ref[...], preferred_element_type=jnp.float32)
    h1 = jnp.maximum(h1 + b1_ref[...], 0.0)
    # fc2 + relu (K=128, N=64; unpadded — padding 64->128 buys no MXU efficiency).
    h2 = jnp.dot(h1.astype(jnp.bfloat16), w2_ref[...],
                 preferred_element_type=jnp.float32)
    h2 = jnp.maximum(h2 + b2_ref[...], 0.0)
    # fc3 + sigmoid (K=64).
    logits = jnp.dot(h2.astype(jnp.bfloat16), w3_ref[...],
                     preferred_element_type=jnp.float32)
    z = logits + b3_ref[...]
    if bf16_sigmoid:
        z = z.astype(jnp.bfloat16)  # bf16 EUP transcendental path on v6e/v7x
    o_ref[...] = jax.nn.sigmoid(z).astype(o_ref.dtype)


def init_params(num_books, key):
    """Deterministic init matching nn.Linear shapes (weights stored transposed, f32)."""
    k1, k2, k3, k4, k5, k6 = jax.random.split(key, 6)

    def lin(kw, kb, fan_in, fan_out):
        bound = 1.0 / jnp.sqrt(fan_in)
        w = jax.random.uniform(kw, (fan_in, fan_out), jnp.float32, -bound, bound)
        b = jax.random.uniform(kb, (1, fan_out), jnp.float32, -bound, bound)
        return w, b

    w1, b1 = lin(k1, k2, num_books, HIDDEN1)
    w2, b2 = lin(k3, k4, HIDDEN1, HIDDEN2)
    w3, b3 = lin(k5, k6, HIDDEN2, num_books)
    return {"w1": w1, "b1": b1, "w2": w2, "b2": b2, "w3": w3, "b3": b3}


def prepare_params(params):
    """One-time weight prep (do NOT call per forward): bf16 weights, f32 biases,
    fc3 output columns zero-padded to a 128 multiple for lane-dense stores."""
    num_books = params["w1"].shape[0]
    n_pad = _round_up(num_books, 128)
    pad_n = n_pad - num_books
    prepped = {
        "w1": params["w1"].astype(jnp.bfloat16),                      # [N, 128]
        "b1": params["b1"].reshape(1, HIDDEN1).astype(jnp.float32),   # [1, 128]
        "w2": params["w2"].astype(jnp.bfloat16),                      # [128, 64]
        "b2": params["b2"].reshape(1, HIDDEN2).astype(jnp.float32),   # [1, 64]
        "w3": jnp.pad(params["w3"], ((0, 0), (0, pad_n))).astype(jnp.bfloat16),  # [64, n_pad]
        "b3": jnp.pad(params["b3"].reshape(1, -1),
                      ((0, 0), (0, pad_n))).astype(jnp.float32),      # [1, n_pad]
        "num_books": num_books,
    }
    return prepped


def _vmem_limit_bytes(tb, n_in, n_pad, single_buffer_weights, kind):
    """Shape-derived VMEM budget, clamped to the chip's physical VMEM."""
    bf, f32 = 2, 4
    wbuf = 1 if single_buffer_weights else 2
    resident = wbuf * (n_in * HIDDEN1 * bf + HIDDEN1 * f32
                       + HIDDEN1 * HIDDEN2 * bf + HIDDEN2 * f32
                       + HIDDEN2 * n_pad * bf + n_pad * f32)
    moving = 2 * tb * n_in * f32 + 2 * tb * n_pad * bf          # x (f32) + out (bf16), dbl-buf
    temps = tb * n_pad * f32 + tb * n_pad * bf + 3 * tb * HIDDEN1 * f32  # logits / sigmoid / h1,h2
    need = int((resident + moving + temps) * 1.4) + (4 << 20)
    phys = (64 << 20) if "v7" in kind else (128 << 20)
    try:
        phys = pltpu.get_tpu_info().vmem_capacity_bytes
    except Exception:
        pass
    cap = min(int(phys * 0.8), 100 << 20)
    return int(max(32 << 20, min(need, cap)))


def recommender_forward(x, prepped, *, batch_tile=None, out_dtype=jnp.bfloat16):
    """x: [B, num_books] float32. prepped: output of prepare_params(). Returns
    [B, num_books] in out_dtype (default bf16)."""
    B, num_books = x.shape
    assert num_books == prepped["num_books"]
    n_pad = prepped["w3"].shape[1]

    kind = _device_kind()
    newer = ("v6" in kind) or ("v7" in kind)
    if batch_tile is None:
        batch_tile = 256 if newer else 128   # 256-row LHS fills the 256-deep MXU on v6e/v7x
    tb = B if B < 8 else min(batch_tile, _round_up(B, 8))
    grid = (pl.cdiv(B, tb),)                 # no batch padding: last tile is masked by Pallas

    kernel = functools.partial(_mlp_kernel, bf16_sigmoid=newer)

    moving = lambda i: (i, 0)      # x / output: walk batch tiles
    resident = lambda i: (0, 0)    # weights & biases: stay resident in VMEM

    def run(single_buffer_weights):
        if single_buffer_weights:
            rspec = lambda shape: pl.BlockSpec(shape, resident,
                                               pipeline_mode=pl.Buffered(1))
        else:
            rspec = lambda shape: pl.BlockSpec(shape, resident)
        in_specs = [
            pl.BlockSpec((tb, num_books), moving),   # x (f32, cast in-kernel)
            rspec((num_books, HIDDEN1)),             # w1
            rspec((1, HIDDEN1)),                     # b1
            rspec((HIDDEN1, HIDDEN2)),               # w2
            rspec((1, HIDDEN2)),                     # b2
            rspec((HIDDEN2, n_pad)),                 # w3 (unpadded K=64, lane-padded N)
            rspec((1, n_pad)),                       # b3
        ]
        return pl.pallas_call(
            kernel,
            out_shape=jax.ShapeDtypeStruct((B, n_pad), out_dtype),
            grid_spec=pltpu.PrefetchScalarGridSpec(
                num_scalar_prefetch=0,
                grid=grid,
                in_specs=in_specs,
                out_specs=pl.BlockSpec((tb, n_pad), moving),
            ),
            compiler_params=pltpu.CompilerParams(
                dimension_semantics=("parallel",),
                vmem_limit_bytes=_vmem_limit_bytes(tb, num_books, n_pad,
                                                   single_buffer_weights, kind),
            ),
        )(x, prepped["w1"], prepped["b1"], prepped["w2"], prepped["b2"],
          prepped["w3"], prepped["b3"])

    try:
        out = run(single_buffer_weights=True)
    except Exception:
        # pipeline_mode / Buffered(1) unsupported on this jax version: fall back to
        # default double-buffered resident specs.
        out = run(single_buffer_weights=False)

    return out[:, :num_books] if n_pad != num_books else out


def reference_forward(x, p):
    """Pure-JAX reference mirroring the kernel's bf16-input / f32-accum math."""
    bf = jnp.bfloat16
    h1 = jnp.maximum(
        jnp.dot(x.astype(bf), p["w1"].astype(bf),
                preferred_element_type=jnp.float32) + p["b1"], 0.0)
    h2 = jnp.maximum(
        jnp.dot(h1.astype(bf), p["w2"].astype(bf),
                preferred_element_type=jnp.float32) + p["b2"], 0.0)
    logits = jnp.dot(h2.astype(bf), p["w3"].astype(bf),
                     preferred_element_type=jnp.float32) + p["b3"]
    return jax.nn.sigmoid(logits)


if __name__ == "__main__":
    key = jax.random.PRNGKey(0)
    num_books = 256
    batch = 200  # non-multiple of the batch tile: exercises the masked partial tile

    kx, kp = jax.random.split(key)
    x = jax.random.uniform(kx, (batch, num_books), jnp.float32)  # rating-vector input
    params = init_params(num_books, kp)
    prepped = prepare_params(params)  # one-time weight prep (bf16 + lane padding)

    out = recommender_forward(x, prepped)
    out = jax.block_until_ready(out)

    ref = reference_forward(x, params)
    assert out.shape == (batch, num_books)
    err = float(jnp.max(jnp.abs(out.astype(jnp.float32) - ref)))
    # bf16 output + (on v6e/v7x) bf16 sigmoid vs f32-sigmoid reference.
    assert err < 2e-2, err

    print("KERNEL_OK")
</pallas_src>

<mosaic_0001>
module attributes {stable_mosaic.version = 11 : i64} {
  func.func @_mlp_kernel(%arg0: i32, %arg1: memref<128x256xf32, #tpu.memory_space<vmem>>, %arg2: memref<256x128xbf16, #tpu.memory_space<vmem>>, %arg3: memref<1x128xf32, #tpu.memory_space<vmem>>, %arg4: memref<128x64xbf16, #tpu.memory_space<vmem>>, %arg5: memref<1x64xf32, #tpu.memory_space<vmem>>, %arg6: memref<64x256xbf16, #tpu.memory_space<vmem>>, %arg7: memref<1x256xf32, #tpu.memory_space<vmem>>, %arg8: memref<128x256xbf16, #tpu.memory_space<vmem>>) attributes {dimension_semantics = [#tpu.dimension_semantics<parallel>], iteration_bounds = array<i64: 2>, scalar_prefetch = 0 : i64, scratch_operands = 0 : i64, tpu.core_type = #tpu.core_type<tc>, window_params = [{transform_indices = @transform_0, window_bounds = array<i64: 128, 256>}, {pipeline_mode = #tpu.pipeline_mode<synchronous>, transform_indices = @transform_1, window_bounds = array<i64: 256, 128>}, {pipeline_mode = #tpu.pipeline_mode<synchronous>, transform_indices = @transform_2, window_bounds = array<i64: 1, 128>}, {pipeline_mode = #tpu.pipeline_mode<synchronous>, transform_indices = @transform_3, window_bounds = array<i64: 128, 64>}, {pipeline_mode = #tpu.pipeline_mode<synchronous>, transform_indices = @transform_4, window_bounds = array<i64: 1, 64>}, {pipeline_mode = #tpu.pipeline_mode<synchronous>, transform_indices = @transform_5, window_bounds = array<i64: 64, 256>}, {pipeline_mode = #tpu.pipeline_mode<synchronous>, transform_indices = @transform_6, window_bounds = array<i64: 1, 256>}, {transform_indices = @transform_7, window_bounds = array<i64: 128, 256>}]} {
    %c0 = arith.constant 0 : index
    %c0_0 = arith.constant 0 : index
    %0 = vector.load %arg1[%c0, %c0_0] : memref<128x256xf32, #tpu.memory_space<vmem>>, vector<128x256xf32>
    %1 = arith.truncf %0 : vector<128x256xf32> to vector<128x256xbf16>
    %c0_1 = arith.constant 0 : index
    %c0_2 = arith.constant 0 : index
    %2 = vector.load %arg2[%c0_1, %c0_2] : memref<256x128xbf16, #tpu.memory_space<vmem>>, vector<256x128xbf16>
    %cst = arith.constant dense<0.000000e+00> : vector<128x128xf32>
    %3 = tpu.matmul %1, %2, %cst {dimension_numbers = #tpu.dot_dimension_numbers<[1], [0], [0], [1], [0, 0, 1, 1], [], []>} : vector<128x256xbf16>, vector<256x128xbf16>, vector<128x128xf32> -> vector<128x128xf32>
    %c0_3 = arith.constant 0 : index
    %c0_4 = arith.constant 0 : index
    %4 = vector.load %arg3[%c0_3, %c0_4] : memref<1x128xf32, #tpu.memory_space<vmem>>, vector<1x128xf32>
    %5 = vector.broadcast %4 : vector<1x128xf32> to vector<128x128xf32>
    %6 = arith.addf %3, %5 : vector<128x128xf32>
    %cst_5 = arith.constant 0.000000e+00 : f32
    %7 = vector.broadcast %cst_5 : f32 to vector<128x128xf32>
    %8 = arith.maximumf %6, %7 : vector<128x128xf32>
    %9 = arith.truncf %8 : vector<128x128xf32> to vector<128x128xbf16>
    %c0_6 = arith.constant 0 : index
    %c0_7 = arith.constant 0 : index
    %10 = vector.load %arg4[%c0_6, %c0_7] : memref<128x64xbf16, #tpu.memory_space<vmem>>, vector<128x64xbf16>
    %cst_8 = arith.constant dense<0.000000e+00> : vector<128x64xf32>
    %11 = tpu.matmul %9, %10, %cst_8 {dimension_numbers = #tpu.dot_dimension_numbers<[1], [0], [0], [1], [0, 0, 1, 1], [], []>} : vector<128x128xbf16>, vector<128x64xbf16>, vector<128x64xf32> -> vector<128x64xf32>
    %c0_9 = arith.constant 0 : index
    %c0_10 = arith.constant 0 : index
    %12 = vector.load %arg5[%c0_9, %c0_10] : memref<1x64xf32, #tpu.memory_space<vmem>>, vector<1x64xf32>
    %13 = vector.broadcast %12 : vector<1x64xf32> to vector<128x64xf32>
    %14 = arith.addf %11, %13 : vector<128x64xf32>
    %cst_11 = arith.constant 0.000000e+00 : f32
    %15 = vector.broadcast %cst_11 : f32 to vector<128x64xf32>
    %16 = arith.maximumf %14, %15 : vector<128x64xf32>
    %17 = arith.truncf %16 : vector<128x64xf32> to vector<128x64xbf16>
    %c0_12 = arith.constant 0 : index
    %c0_13 = arith.constant 0 : index
    %18 = vector.load %arg6[%c0_12, %c0_13] : memref<64x256xbf16, #tpu.memory_space<vmem>>, vector<64x256xbf16>
    %cst_14 = arith.constant dense<0.000000e+00> : vector<128x256xf32>
    %19 = tpu.matmul %17, %18, %cst_14 {dimension_numbers = #tpu.dot_dimension_numbers<[1], [0], [0], [1], [0, 0, 1, 1], [], []>} : vector<128x64xbf16>, vector<64x256xbf16>, vector<128x256xf32> -> vector<128x256xf32>
    %c0_15 = arith.constant 0 : index
    %c0_16 = arith.constant 0 : index
    %20 = vector.load %arg7[%c0_15, %c0_16] : memref<1x256xf32, #tpu.memory_space<vmem>>, vector<1x256xf32>
    %21 = vector.broadcast %20 : vector<1x256xf32> to vector<128x256xf32>
    %22 = arith.addf %19, %21 : vector<128x256xf32>
    %23 = arith.negf %22 : vector<128x256xf32>
    %24 = math.exp %23 : vector<128x256xf32>
    %cst_17 = arith.constant 1.000000e+00 : f32
    %25 = vector.broadcast %cst_17 : f32 to vector<128x256xf32>
    %26 = arith.addf %25, %24 : vector<128x256xf32>
    %27 = arith.divf %25, %26 : vector<128x256xf32>
    %28 = arith.truncf %27 : vector<128x256xf32> to vector<128x256xbf16>
    %c0_18 = arith.constant 0 : index
    %c0_19 = arith.constant 0 : index
    %29 = vector.load %arg8[%c0_18, %c0_19] : memref<128x256xbf16, #tpu.memory_space<vmem>>, vector<128x256xbf16>
    tpu.vector_store %arg8[%c0_18, %c0_19], %28 {strides = array<i32>} : memref<128x256xbf16, #tpu.memory_space<vmem>>, vector<128x256xbf16>,
    return
  }
  func.func @transform_0(%arg0: i32) -> (i32, i32) {
    %c0_i32 = arith.constant 0 : i32
    %c0_i32_0 = arith.constant 0 : i32
    return %arg0, %c0_i32 : i32, i32
  }
  func.func @transform_1(%arg0: i32) -> (i32, i32) {
    %c0_i32 = arith.constant 0 : i32
    %c0_i32_0 = arith.constant 0 : i32
    %c0_i32_1 = arith.constant 0 : i32
    return %c0_i32, %c0_i32_0 : i32, i32
  }
  func.func @transform_2(%arg0: i32) -> (i32, i32) {
    %c0_i32 = arith.constant 0 : i32
    %c0_i32_0 = arith.constant 0 : i32
    %c0_i32_1 = arith.constant 0 : i32
    return %c0_i32, %c0_i32_0 : i32, i32
  }
  func.func @transform_3(%arg0: i32) -> (i32, i32) {
    %c0_i32 = arith.constant 0 : i32
    %c0_i32_0 = arith.constant 0 : i32
    %c0_i32_1 = arith.constant 0 : i32
    return %c0_i32, %c0_i32_0 : i32, i32
  }
  func.func @transform_4(%arg0: i32) -> (i32, i32) {
    %c0_i32 = arith.constant 0 : i32
    %c0_i32_0 = arith.constant 0 : i32
    %c0_i32_1 = arith.constant 0 : i32
    return %c0_i32, %c0_i32_0 : i32, i32
  }
  func.func @transform_5(%arg0: i32) -> (i32, i32) {
    %c0_i32 = arith.constant 0 : i32
    %c0_i32_0 = arith.constant 0 : i32
    %c0_i32_1 = arith.constant 0 : i32
    return %c0_i32, %c0_i32_0 : i32, i32
  }
  func.func @transform_6(%arg0: i32) -> (i32, i32) {
    %c0_i32 = arith.constant 0 : i32
    %c0_i32_0 = arith.constant 0 : i32
    %c0_i32_1 = arith.constant 0 : i32
    return %c0_i32, %c0_i32_0 : i32, i32
  }
  func.func @transform_7(%arg0: i32) -> (i32, i32) {
    %c0_i32 = arith.constant 0 : i32
    %c0_i32_0 = arith.constant 0 : i32
    return %arg0, %c0_i32 : i32, i32
  }
}

module attributes {stable_mosaic.version = 11 : i64} {
  func.func @_mlp_kernel(%arg0: i32, %arg1: memref<128x256xf32, #tpu.memory_space<vmem>>, %arg2: memref<256x128xbf16, #tpu.memory_space<vmem>>, %arg3: memref<1x128xf32, #tpu.memory_space<vmem>>, %arg4: memref<128x64xbf16, #tpu.memory_space<vmem>>, %arg5: memref<1x64xf32, #tpu.memory_space<vmem>>, %arg6: memref<64x256xbf16, #tpu.memory_space<vmem>>, %arg7: memref<1x256xf32, #tpu.memory_space<vmem>>, %arg8: memref<128x256xbf16, #tpu.memory_space<vmem>>) attributes {dimension_semantics = [#tpu.dimension_semantics<parallel>], iteration_bounds = array<i64: 2>, scalar_prefetch = 0 : i64, scratch_operands = 0 : i64, tpu.core_type = #tpu.core_type<tc>, window_params = [{transform_indices = @transform_0, window_bounds = array<i64: 128, 256>}, {pipeline_mode = #tpu.pipeline_mode<synchronous>, transform_indices = @transform_1, window_bounds = array<i64: 256, 128>}, {pipeline_mode = #tpu.pipeline_mode<synchronous>, transform_indices = @transform_2, window_bounds = array<i64: 1, 128>}, {pipeline_mode = #tpu.pipeline_mode<synchronous>, transform_indices = @transform_3, window_bounds = array<i64: 128, 64>}, {pipeline_mode = #tpu.pipeline_mode<synchronous>, transform_indices = @transform_4, window_bounds = array<i64: 1, 64>}, {pipeline_mode = #tpu.pipeline_mode<synchronous>, transform_indices = @transform_5, window_bounds = array<i64: 64, 256>}, {pipeline_mode = #tpu.pipeline_mode<synchronous>, transform_indices = @transform_6, window_bounds = array<i64: 1, 256>}, {transform_indices = @transform_7, window_bounds = array<i64: 128, 256>}]} {
    %c0 = arith.constant 0 : index
    %c0_0 = arith.constant 0 : index
    %0 = vector.load %arg1[%c0, %c0_0] : memref<128x256xf32, #tpu.memory_space<vmem>>, vector<128x256xf32>
    %1 = arith.truncf %0 : vector<128x256xf32> to vector<128x256xbf16>
    %c0_1 = arith.constant 0 : index
    %c0_2 = arith.constant 0 : index
    %2 = vector.load %arg2[%c0_1, %c0_2] : memref<256x128xbf16, #tpu.memory_space<vmem>>, vector<256x128xbf16>
    %cst = arith.constant dense<0.000000e+00> : vector<128x128xf32>
    %3 = tpu.matmul %1, %2, %cst {dimension_numbers = #tpu.dot_dimension_numbers<[1], [0], [0], [1], [0, 0, 1, 1], [], []>} : vector<128x256xbf16>, vector<256x128xbf16>, vector<128x128xf32> -> vector<128x128xf32>
    %c0_3 = arith.constant 0 : index
    %c0_4 = arith.constant 0 : index
    %4 = vector.load %arg3[%c0_3, %c0_4] : memref<1x128xf32, #tpu.memory_space<vmem>>, vector<1x128xf32>
    %5 = vector.broadcast %4 : vector<1x128xf32> to vector<128x128xf32>
    %6 = arith.addf %3, %5 : vector<128x128xf32>
    %cst_5 = arith.constant 0.000000e+00 : f32
    %7 = vector.broadcast %cst_5 : f32 to vector<128x128xf32>
    %8 = arith.maximumf %6, %7 : vector<128x128xf32>
    %9 = arith.truncf %8 : vector<128x128xf32> to vector<128x128xbf16>
    %c0_6 = arith.constant 0 : index
    %c0_7 = arith.constant 0 : index
    %10 = vector.load %arg4[%c0_6, %c0_7] : memref<128x64xbf16, #tpu.memory_space<vmem>>, vector<128x64xbf16>
    %cst_8 = arith.constant dense<0.000000e+00> : vector<128x64xf32>
    %11 = tpu.matmul %9, %10, %cst_8 {dimension_numbers = #tpu.dot_dimension_numbers<[1], [0], [0], [1], [0, 0, 1, 1], [], []>} : vector<128x128xbf16>, vector<128x64xbf16>, vector<128x64xf32> -> vector<128x64xf32>
    %c0_9 = arith.constant 0 : index
    %c0_10 = arith.constant 0 : index
    %12 = vector.load %arg5[%c0_9, %c0_10] : memref<1x64xf32, #tpu.memory_space<vmem>>, vector<1x64xf32>
    %13 = vector.broadcast %12 : vector<1x64xf32> to vector<128x64xf32>
    %14 = arith.addf %11, %13 : vector<128x64xf32>
    %cst_11 = arith.constant 0.000000e+00 : f32
    %15 = vector.broadcast %cst_11 : f32 to vector<128x64xf32>
    %16 = arith.maximumf %14, %15 : vector<128x64xf32>
    %17 = arith.truncf %16 : vector<128x64xf32> to vector<128x64xbf16>
    %c0_12 = arith.constant 0 : index
    %c0_13 = arith.constant 0 : index
    %18 = vector.load %arg6[%c0_12, %c0_13] : memref<64x256xbf16, #tpu.memory_space<vmem>>, vector<64x256xbf16>
    %cst_14 = arith.constant dense<0.000000e+00> : vector<128x256xf32>
    %19 = tpu.matmul %17, %18, %cst_14 {dimension_numbers = #tpu.dot_dimension_numbers<[1], [0], [0], [1], [0, 0, 1, 1], [], []>} : vector<128x64xbf16>, vector<64x256xbf16>, vector<128x256xf32> -> vector<128x256xf32>
    %c0_15 = arith.constant 0 : index
    %c0_16 = arith.constant 0 : index
    %20 = vector.load %arg7[%c0_15, %c0_16] : memref<1x256xf32, #tpu.memory_space<vmem>>, vector<1x256xf32>
    %21 = vector.broadcast %20 : vector<1x256xf32> to vector<128x256xf32>
    %22 = arith.addf %19, %21 : vector<128x256xf32>
    %23 = arith.negf %22 : vector<128x256xf32>
    %24 = math.exp %23 : vector<128x256xf32>
    %cst_17 = arith.constant 1.000000e+00 : f32
    %25 = vector.broadcast %cst_17 : f32 to vector<128x256xf32>
    %26 = arith.addf %25, %24 : vector<128x256xf32>
    %27 = arith.divf %25, %26 : vector<128x256xf32>
    %28 = arith.truncf %27 : vector<128x256xf32> to vector<128x256xbf16>
    %c0_18 = arith.constant 0 : index
    %c0_19 = arith.constant 0 : index
    %29 = vector.load %arg8[%c0_18, %c0_19] : memref<128x256xbf16, #tpu.memory_space<vmem>>, vector<128x256xbf16>
    tpu.vector_store %arg8[%c0_18, %c0_19], %28 {strides = array<i32>} : memref<128x256xbf16, #tpu.memory_space<vmem>>, vector<128x256xbf16>,
    return
  }
  func.func @transform_0(%arg0: i32) -> (i32, i32) {
    %c0_i32 = arith.constant 0 : i32
    %c0_i32_0 = arith.constant 0 : i32
    return %arg0, %c0_i32 : i32, i32
  }
  func.func @transform_1(%arg0: i32) -> (i32, i32) {
    %c0_i32 = arith.constant 0 : i32
    %c0_i32_0 = arith.constant 0 : i32
    %c0_i32_1 = arith.constant 0 : i32
    return %c0_i32, %c0_i32_0 : i32, i32
  }
  func.func @transform_2(%arg0: i32) -> (i32, i32) {
    %c0_i32 = arith.constant 0 : i32
    %c0_i32_0 = arith.constant 0 : i32
    %c0_i32_1 = arith.constant 0 : i32
    return %c0_i32, %c0_i32_0 : i32, i32
  }
  func.func @transform_3(%arg0: i32) -> (i32, i32) {
    %c0_i32 = arith.constant 0 : i32
    %c0_i32_0 = arith.constant 0 : i32
    %c0_i32_1 = arith.constant 0 : i32
    return %c0_i32, %c0_i32_0 : i32, i32
  }
  func.func @transform_4(%arg0: i32) -> (i32, i32) {
    %c0_i32 = arith.constant 0 : i32
    %c0_i32_0 = arith.constant 0 : i32
    %c0_i32_1 = arith.constant 0 : i32
    return %c0_i32, %c0_i32_0 : i32, i32
  }
  func.func @transform_5(%arg0: i32) -> (i32, i32) {
    %c0_i32 = arith.constant 0 : i32
    %c0_i32_0 = arith.constant 0 : i32
    %c0_i32_1 = arith.constant 0 : i32
    return %c0_i32, %c0_i32_0 : i32, i32
  }
  func.func @transform_6(%arg0: i32) -> (i32, i32) {
    %c0_i32 = arith.constant 0 : i32
    %c0_i32_0 = arith.constant 0 : i32
    %c0_i32_1 = arith.constant 0 : i32
    return %c0_i32, %c0_i32_0 : i32, i32
  }
  func.func @transform_7(%arg0: i32) -> (i32, i32) {
    %c0_i32 = arith.constant 0 : i32
    %c0_i32_0 = arith.constant 0 : i32
    return %arg0, %c0_i32 : i32, i32
  }
}

</mosaic_0001>

<llo_original>
// kernel: tpu_custom_call.1
$region0: #{tpu_custom_call.1}
  #allocation0 [shape = 'u32[]', space=smem, size = 0x4, offset = 0x4, fixed_abs, tag = 'smem constant byte address 0x4 - core index']
  #allocation1 [shape = 'u32[144,128]{1,0:T(1,128)}', space=vmem, size = 0x12000, scoped, tag = 'internal scratch']
  %s0 = inlined_call_operand.hbm [shape: f32[200,256], index: 0, kind: input, shape index: {}]
  %s1 = inlined_call_operand.hbm [shape: bf16[256,128], index: 1, kind: input, shape index: {}]
  %s2 = inlined_call_operand.vmem [shape: f32[1,128], index: 2, kind: input, shape index: {}]
  %s3 = inlined_call_operand.vmem [shape: bf16[128,64], index: 3, kind: input, shape index: {}]
  %s4 = inlined_call_operand.vmem [shape: f32[1,64], index: 4, kind: input, shape index: {}]
  %s5 = inlined_call_operand.vmem [shape: bf16[64,256], index: 5, kind: input, shape index: {}]
  %s6 = inlined_call_operand.vmem [shape: f32[1,256], index: 6, kind: input, shape index: {}]
  %s7 = inlined_call_operand.hbm [shape: bf16[200,256], index: 7, kind: output, shape index: {}]
  %s8 = sld [smem:[#allocation0]]
  $region69: #{tpu_custom_call.1} parent=0
    _
  %s10 = ssub.s32 1, %s8
  %s11 = scalar_select 0, %s10, %s8
  $region1: #{tpu_custom_call.1} parent=0
    #allocation2 [shape = 'u8[262144]{0}', space=vmem, size = 0x40000, scoped, tag = 'input window, operand 0']
    #allocation3 [shape = 's32[2]{0}', space=sflag, size = 0x8, scoped, tag = 'scoped memory for tpu_custom_call.1']
    #allocation4 [shape = 's32[2]{0}', space=sflag, size = 0x8, scoped, tag = 'scoped memory for tpu_custom_call.1']
    #allocation5 [shape = 'u8[65536]{0}', space=vmem, size = 0x10000, scoped, tag = 'input window, operand 1, single buffered']
    #allocation6 [shape = 's32[1]{0}', space=sflag, size = 0x4, scoped, tag = 'scoped memory for tpu_custom_call.1']
    #allocation7 [shape = 'u8[131072]{0}', space=vmem, size = 0x20000, scoped, tag = 'output window, operand 0']
    %12 = vsyncpa [#allocation3], 0
    %s13 = scalar_lea.sflag [#allocation3], 1
    %14 = vsyncpa %s13, 0
    %15 = vsyncpa [#allocation6], 0
    %16 = vsyncpa [#allocation4], 0
    %s17 = scalar_lea.sflag [#allocation4], 1
    %18 = vsyncpa %s17, 0
    loop: start=0, step=1, limit=4
    $region2: #{tpu_custom_call.1} parent=1 // loop_pre_header
      _
    $region3: #{tpu_custom_call.1} parent=1 // loop_header
      %s20 = sphi 0, %s24
      %p21 = scmp.ge.s32.totalorder %s20, 4
      %s30 = sphi 0, %s32
      %s33 = sphi 0, %s30
      %s34 = sphi 0, %s33
      %s50 = sphi 0, %s34
      %s54 = sphi 0, %s54
      %s56 = sphi 0, %s54
      %s57 = sphi 0, %s56
      %s71 = sphi 0, %s57
      %s75 = sphi 0, %s75
      %s77 = sphi 0, %s75
      %s78 = sphi 0, %s77
      %s92 = sphi 0, %s78
      %s96 = sphi 0, %s96
      %s98 = sphi 0, %s96
      %s99 = sphi 0, %s98
      %s113 = sphi 0, %s99
      %s117 = sphi 0, %s117
      %s119 = sphi 0, %s117
      %s120 = sphi 0, %s119
      %s134 = sphi 0, %s120
      %s138 = sphi 0, %s138
      %s140 = sphi 0, %s138
      %s141 = sphi 0, %s140
      %s155 = sphi 0, %s141
      %s159 = sphi 0, %s159
      %s161 = sphi 0, %s159
      %s162 = sphi 0, %s161
      %s176 = sphi 0, %s162
      %s182 = sphi 0, %s184
      %s185 = sphi 0, %s182
      %s186 = sphi 0, %s185
      %s202 = sphi 0, %s186
    $region4: #{tpu_custom_call.1} parent=1 // loop_header_branch
      %23 = sbr.rel (%p21) target = $region8
    $region5: #{tpu_custom_call.1} parent=1 // loop_body
      %s25 = ssub.s32 %s20, 1
      %s26 = ssub.s32 %s20, 2
      %s27 = sadd.s32 %s20, 1
      %s28 = ssub.s32 %s20, %s27
      %p29 = scmp.eq.s32.totalorder %s28, 0
      %s31 = sadd.s32 %s30, 1
      %s32 = scalar_select %p29, %s30, %s31
      %p35 = pneg %p29
      %p36 = scmp.eq.s32.totalorder %s20, 1
      %p37 = por %p35, %p36
      %p38 = scmp.ne.s32.totalorder %s30, %s33
      %p39 = scmp.eq.s32.totalorder %s20, 0
      %p40 = por %p38, %p39
      %p41 = scmp.ne.s32.totalorder %s30, %s33
      %p42 = scmp.eq.s32.totalorder %s25, 1
      %p43 = por %p41, %p42
      %p44 = scmp.ne.s32.totalorder %s33, %s34
      %p45 = scmp.eq.s32.totalorder %s25, 0
      %p46 = por %p44, %p45
      %p47 = scmp.ne.s32.totalorder %s33, %s34
      %p48 = scmp.eq.s32.totalorder %s26, 1
      %p49 = por %p47, %p48
      %p51 = scmp.ne.s32.totalorder %s34, %s50
      %p52 = scmp.eq.s32.totalorder %s26, 0
      %p53 = por %p51, %p52
      %s55 = sadd.s32 %s54, 1
      %p58 = scmp.eq.s32.totalorder %s20, 1
      %p59 = scmp.ne.s32.totalorder %s54, %s56
      %p60 = scmp.eq.s32.totalorder %s20, 0
      %p61 = por %p59, %p60
      %p62 = scmp.ne.s32.totalorder %s54, %s56
      %p63 = scmp.eq.s32.totalorder %s25, 1
      %p64 = por %p62, %p63
      %p65 = scmp.ne.s32.totalorder %s56, %s57
      %p66 = scmp.eq.s32.totalorder %s25, 0
      %p67 = por %p65, %p66
      %p68 = scmp.ne.s32.totalorder %s56, %s57
      %p69 = scmp.eq.s32.totalorder %s26, 1
      %p70 = por %p68, %p69
      %p72 = scmp.ne.s32.totalorder %s57, %s71
      %p73 = scmp.eq.s32.totalorder %s26, 0
      %p74 = por %p72, %p73
      %s76 = sadd.s32 %s75, 1
      %p79 = scmp.eq.s32.totalorder %s20, 1
      %p80 = scmp.ne.s32.totalorder %s75, %s77
      %p81 = scmp.eq.s32.totalorder %s20, 0
      %p82 = por %p80, %p81
      %p83 = scmp.ne.s32.totalorder %s75, %s77
      %p84 = scmp.eq.s32.totalorder %s25, 1
      %p85 = por %p83, %p84
      %p86 = scmp.ne.s32.totalorder %s77, %s78
      %p87 = scmp.eq.s32.totalorder %s25, 0
      %p88 = por %p86, %p87
      %p89 = scmp.ne.s32.totalorder %s77, %s78
      %p90 = scmp.eq.s32.totalorder %s26, 1
      %p91 = por %p89, %p90
      %p93 = scmp.ne.s32.totalorder %s78, %s92
      %p94 = scmp.eq.s32.totalorder %s26, 0
      %p95 = por %p93, %p94
      %s97 = sadd.s32 %s96, 1
      %p100 = scmp.eq.s32.totalorder %s20, 1
      %p101 = scmp.ne.s32.totalorder %s96, %s98
      %p102 = scmp.eq.s32.totalorder %s20, 0
      %p103 = por %p101, %p102
      %p104 = scmp.ne.s32.totalorder %s96, %s98
      %p105 = scmp.eq.s32.totalorder %s25, 1
      %p106 = por %p104, %p105
      %p107 = scmp.ne.s32.totalorder %s98, %s99
      %p108 = scmp.eq.s32.totalorder %s25, 0
      %p109 = por %p107, %p108
      %p110 = scmp.ne.s32.totalorder %s98, %s99
      %p111 = scmp.eq.s32.totalorder %s26, 1
      %p112 = por %p110, %p111
      %p114 = scmp.ne.s32.totalorder %s99, %s113
      %p115 = scmp.eq.s32.totalorder %s26, 0
      %p116 = por %p114, %p115
      %s118 = sadd.s32 %s117, 1
      %p121 = scmp.eq.s32.totalorder %s20, 1
      %p122 = scmp.ne.s32.totalorder %s117, %s119
      %p123 = scmp.eq.s32.totalorder %s20, 0
      %p124 = por %p122, %p123
      %p125 = scmp.ne.s32.totalorder %s117, %s119
      %p126 = scmp.eq.s32.totalorder %s25, 1
      %p127 = por %p125, %p126
      %p128 = scmp.ne.s32.totalorder %s119, %s120
      %p129 = scmp.eq.s32.totalorder %s25, 0
      %p130 = por %p128, %p129
      %p131 = scmp.ne.s32.totalorder %s119, %s120
      %p132 = scmp.eq.s32.totalorder %s26, 1
      %p133 = por %p131, %p132
      %p135 = scmp.ne.s32.totalorder %s120, %s134
      %p136 = scmp.eq.s32.totalorder %s26, 0
      %p137 = por %p135, %p136
      %s139 = sadd.s32 %s138, 1
      %p142 = scmp.eq.s32.totalorder %s20, 1
      %p143 = scmp.ne.s32.totalorder %s138, %s140
      %p144 = scmp.eq.s32.totalorder %s20, 0
      %p145 = por %p143, %p144
      %p146 = scmp.ne.s32.totalorder %s138, %s140
      %p147 = scmp.eq.s32.totalorder %s25, 1
      %p148 = por %p146, %p147
      %p149 = scmp.ne.s32.totalorder %s140, %s141
      %p150 = scmp.eq.s32.totalorder %s25, 0
      %p151 = por %p149, %p150
      %p152 = scmp.ne.s32.totalorder %s140, %s141
      %p153 = scmp.eq.s32.totalorder %s26, 1
      %p154 = por %p152, %p153
      %p156 = scmp.ne.s32.totalorder %s141, %s155
      %p157 = scmp.eq.s32.totalorder %s26, 0
      %p158 = por %p156, %p157
      %s160 = sadd.s32 %s159, 1
      %p163 = scmp.eq.s32.totalorder %s20, 1
      %p164 = scmp.ne.s32.totalorder %s159, %s161
      %p165 = scmp.eq.s32.totalorder %s20, 0
      %p166 = por %p164, %p165
      %p167 = scmp.ne.s32.totalorder %s159, %s161
      %p168 = scmp.eq.s32.totalorder %s25, 1
      %p169 = por %p167, %p168
      %p170 = scmp.ne.s32.totalorder %s161, %s162
      %p171 = scmp.eq.s32.totalorder %s25, 0
      %p172 = por %p170, %p171
      %p173 = scmp.ne.s32.totalorder %s161, %s162
      %p174 = scmp.eq.s32.totalorder %s26, 1
      %p175 = por %p173, %p174
      %p177 = scmp.ne.s32.totalorder %s162, %s176
      %p178 = scmp.eq.s32.totalorder %s26, 0
      %p179 = por %p177, %p178
      %s180 = ssub.s32 %s20, %s27
      %p181 = scmp.eq.s32.totalorder %s180, 0
      %s183 = sadd.s32 %s182, 1
      %s184 = scalar_select %p181, %s182, %s183
      %p187 = pneg %p181
      %p188 = scmp.eq.s32.totalorder %s20, 1
      %p189 = por %p187, %p188
      %p190 = scmp.ne.s32.totalorder %s182, %s185
      %p191 = scmp.eq.s32.totalorder %s20, 0
      %p192 = por %p190, %p191
      %p193 = scmp.ne.s32.totalorder %s182, %s185
      %p194 = scmp.eq.s32.totalorder %s25, 1
      %p195 = por %p193, %p194
      %p196 = scmp.ne.s32.totalorder %s185, %s186
      %p197 = scmp.eq.s32.totalorder %s25, 0
      %p198 = por %p196, %p197
      %p199 = scmp.ne.s32.totalorder %s185, %s186
      %p200 = scmp.eq.s32.totalorder %s26, 1
      %p201 = por %p199, %p200
      %p203 = scmp.ne.s32.totalorder %s186, %s202
      %p204 = scmp.eq.s32.totalorder %s26, 0
      %p205 = por %p203, %p204
      %p206 = scmp.le.s32.totalorder 1, %s20
      %p207 = scmp.lt.s32.totalorder %s20, 3
      %p208 = pnand %p206, %p207
      %p209 = pneg %p208
      // Predicated region
      $region9: #{tpu_custom_call.1} parent=5 // pred_check
        _
      $region10: #{tpu_custom_call.1} parent=5 // pred_check_branch
        %211 = sbr.rel (%p208) target = $region12
      $region11: #{tpu_custom_call.1} parent=5 // pred_region
        %s212 = ssub.s32 %s20, 1
        // Predicated region
        $region13: #{tpu_custom_call.1} parent=11 // pred_check
          %p213 = pneg %p67
        $region14: #{tpu_custom_call.1} parent=11 // pred_check_branch
          %215 = sbr.rel (%p213) target = $region16
        $region15: #{tpu_custom_call.1} parent=11 // pred_region
          %s217 = ssub.s32 2048, 2048
          %218 = vsyncadd [#allocation6], %s217
          %s219 = sshll.u32 [#allocation5], 4
          %s220 = int_to_ptr.vmem [resolvable:$true] %s219
          %225 = dma.hbm_to_vmem [thread:$0]  %s1, 2048, %s220, [#allocation6], 64, 64, 4
        $region16: #{tpu_custom_call.1} parent=11 // pred_fallthru
          _
        // Predicated region
        $region17: #{tpu_custom_call.1} parent=11 // pred_check
          %p226 = pneg %p88
        $region18: #{tpu_custom_call.1} parent=11 // pred_check_branch
          %228 = sbr.rel (%p226) target = $region20
        $region19: #{tpu_custom_call.1} parent=11 // pred_region
          _
        $region20: #{tpu_custom_call.1} parent=11 // pred_fallthru
          _
        // Predicated region
        $region21: #{tpu_custom_call.1} parent=11 // pred_check
          %p229 = pneg %p109
        $region22: #{tpu_custom_call.1} parent=11 // pred_check_branch
          %231 = sbr.rel (%p229) target = $region24
        $region23: #{tpu_custom_call.1} parent=11 // pred_region
          _
        $region24: #{tpu_custom_call.1} parent=11 // pred_fallthru
          _
        // Predicated region
        $region25: #{tpu_custom_call.1} parent=11 // pred_check
          %p232 = pneg %p130
        $region26: #{tpu_custom_call.1} parent=11 // pred_check_branch
          %234 = sbr.rel (%p232) target = $region28
        $region27: #{tpu_custom_call.1} parent=11 // pred_region
          _
        $region28: #{tpu_custom_call.1} parent=11 // pred_fallthru
          _
        // Predicated region
        $region29: #{tpu_custom_call.1} parent=11 // pred_check
          %p235 = pneg %p151
        $region30: #{tpu_custom_call.1} parent=11 // pred_check_branch
          %237 = sbr.rel (%p235) target = $region32
        $region31: #{tpu_custom_call.1} parent=11 // pred_region
          _
        $region32: #{tpu_custom_call.1} parent=11 // pred_fallthru
          _
        // Predicated region
        $region33: #{tpu_custom_call.1} parent=11 // pred_check
          %p238 = pneg %p172
        $region34: #{tpu_custom_call.1} parent=11 // pred_check_branch
          %240 = sbr.rel (%p238) target = $region36
        $region35: #{tpu_custom_call.1} parent=11 // pred_region
          _
        $region36: #{tpu_custom_call.1} parent=11 // pred_fallthru
          _
      $region12: #{tpu_custom_call.1} parent=5 // pred_fallthru
        _
      %p241 = scmp.lt.s32.totalorder %s20, 2
      // Predicated region
      $region37: #{tpu_custom_call.1} parent=5 // pred_check
        %p242 = pneg %p241
      $region38: #{tpu_custom_call.1} parent=5 // pred_check_branch
        %244 = sbr.rel (%p242) target = $region40
      $region39: #{tpu_custom_call.1} parent=5 // pred_region
        // Predicated region
        $region41: #{tpu_custom_call.1} parent=39 // pred_check
          %p245 = pneg %p40
        $region42: #{tpu_custom_call.1} parent=39 // pred_check_branch
          %247 = sbr.rel (%p245) target = $region44
        $region43: #{tpu_custom_call.1} parent=39 // pred_region
          %s248 = sand.u32 %s30, 1
          %s249 = scalar_lea.sflag [#allocation3], %s248
          %s250 = sand.u32 %s30, 1
          %s251 = smul.addr %s250, 256
          %s252 = scalar_lea.vmem [#allocation2], %s251
          %s253 = smul.u32 16, %s20
          %s254 = ssub.s32 25, %s253
          %p255 = scmp.lt.s32.totalorder %s254, 16
          %s256 = scalar_select %p255, %s254, 16
          %s257 = smul.u32 128, %s256
          %s258 = smul.u32 %s257, 2
          %s260 = ssub.s32 4096, %s258
          %261 = vsyncadd %s249, %s260
          %p262 = scmp.ne.s32.totalorder 0, %s258
          %s263 = smul.addr %s253, 2
          %s264 = smul.addr %s263, 128
          %s265 = scalar_lea.hbm %s0, %s264
          %s266 = smul.u32 16, %s256
          %s267 = sshll.u32 %s252, 4
          %s268 = int_to_ptr.vmem [resolvable:$true] %s267
          %s269 = sshll.u32 %s266, 4
          %273 = dma.hbm_to_vmem [thread:$0]  (%p262), %s265, %s269, %s268, %s249, 256, 256, 16
        $region44: #{tpu_custom_call.1} parent=39 // pred_fallthru
          _
      $region40: #{tpu_custom_call.1} parent=5 // pred_fallthru
        _
      %p274 = scmp.le.s32.totalorder 1, %s20
      %p275 = scmp.lt.s32.totalorder %s20, 3
      %p276 = pnand %p274, %p275
      %p277 = pneg %p276
      // Predicated region
      $region45: #{tpu_custom_call.1} parent=5 // pred_check
        _
      $region46: #{tpu_custom_call.1} parent=5 // pred_check_branch
        %279 = sbr.rel (%p276) target = $region48
      $region47: #{tpu_custom_call.1} parent=5 // pred_region
        %s280 = ssub.s32 %s20, 1
        %s281 = sand.u32 %s33, 1
        %s282 = scalar_lea.sflag [#allocation3], %s281
        %s283 = sand.u32 %s33, 1
        %s284 = smul.addr %s283, 256
        %s285 = scalar_lea.vmem [#allocation2], %s284
        // Predicated region
        $region49: #{tpu_custom_call.1} parent=47 // pred_check
          %p286 = pneg %p46
        $region50: #{tpu_custom_call.1} parent=47 // pred_check_branch
          %288 = sbr.rel (%p286) target = $region52
        $region51: #{tpu_custom_call.1} parent=47 // pred_region
          %289 = dma.done %s282, 4096
        $region52: #{tpu_custom_call.1} parent=47 // pred_fallthru
          _
        // Predicated region
        $region53: #{tpu_custom_call.1} parent=47 // pred_check
          %p290 = pneg %p67
        $region54: #{tpu_custom_call.1} parent=47 // pred_check_branch
          %292 = sbr.rel (%p290) target = $region56
        $region55: #{tpu_custom_call.1} parent=47 // pred_region
          %293 = dma.done [#allocation6], 2048
        $region56: #{tpu_custom_call.1} parent=47 // pred_fallthru
          _
        %s294 = sand.u32 %s33, 1
        %s295 = scalar_lea.sflag [#allocation3], %s294
        %s296 = sand.u32 %s33, 1
        %s297 = smul.addr %s296, 256
        %s298 = scalar_lea.vmem [#allocation2], %s297
        %p299 = pneg %p46
        %p300 = pneg %p43
        %p301 = pneg %p67
        %p302 = pneg %p64
        %p303 = pneg %p88
        %p304 = pneg %p85
        %p305 = pneg %p109
        %p306 = pneg %p106
        %p307 = pneg %p130
        %p308 = pneg %p127
        %p309 = pneg %p151
        %p310 = pneg %p148
        %p311 = pneg %p172
        %p312 = pneg %p169
        %p313 = pneg %p198
        %p314 = pneg %p195
        %s315 = sand.u32 %s185, 1
        %s316 = scalar_lea.sflag [#allocation4], %s315
        %s317 = sand.u32 %s185, 1
        %s318 = smul.addr %s317, 128
        %s319 = scalar_lea.vmem [#allocation7], %s318
        %s320 = smul.u32 16, %s25
        %s321 = ssub.s32 25, %s320
        %p322 = scmp.lt.s32.totalorder %s321, 16
        %s323 = scalar_select %p322, %s321, 16
        %s324 = smul.u32 128, %s323
        %s325 = smul.u32 %s324, 2
        %s326 = smul.u32 16, %s25
        %s327 = ssub.s32 25, %s326
        %p328 = scmp.lt.s32.totalorder %s327, 16
        %s329 = scalar_select %p328, %s327, 16
        %s330 = smul.u32 64, %s329
        %s331 = smul.u32 %s330, 2
        %v333 = vld [vmem:[%s285] sm:$0xff]
        %v334 = vld [vmem:[%s285 + $0x8] sm:$0xff]
        %v335 = vld [vmem:[%s285 + $0x10] sm:$0xff]
        %v336 = vld [vmem:[%s285 + $0x18] sm:$0xff]
        %v337 = vld [vmem:[%s285 + $0x20] sm:$0xff]
        %v338 = vld [vmem:[%s285 + $0x28] sm:$0xff]
        %v339 = vld [vmem:[%s285 + $0x30] sm:$0xff]
        %v340 = vld [vmem:[%s285 + $0x38] sm:$0xff]
        %v341 = vld [vmem:[%s285 + $0x40] sm:$0xff]
        %v342 = vld [vmem:[%s285 + $0x48] sm:$0xff]
        %v343 = vld [vmem:[%s285 + $0x50] sm:$0xff]
        %v344 = vld [vmem:[%s285 + $0x58] sm:$0xff]
        %v345 = vld [vmem:[%s285 + $0x60] sm:$0xff]
        %v346 = vld [vmem:[%s285 + $0x68] sm:$0xff]
        %v347 = vld [vmem:[%s285 + $0x70] sm:$0xff]
        %v348 = vld [vmem:[%s285 + $0x78] sm:$0xff]
        %v349 = vld [vmem:[%s285 + $0x80] sm:$0xff]
        %v350 = vld [vmem:[%s285 + $0x88] sm:$0xff]
        %v351 = vld [vmem:[%s285 + $0x90] sm:$0xff]
        %v352 = vld [vmem:[%s285 + $0x98] sm:$0xff]
        %v353 = vld [vmem:[%s285 + $0xa0] sm:$0xff]
        %v354 = vld [vmem:[%s285 + $0xa8] sm:$0xff]
        %v355 = vld [vmem:[%s285 + $0xb0] sm:$0xff]
        %v356 = vld [vmem:[%s285 + $0xb8] sm:$0xff]
        %v357 = vld [vmem:[%s285 + $0xc0] sm:$0xff]
        %v358 = vld [vmem:[%s285 + $0xc8] sm:$0xff]
        %v359 = vld [vmem:[%s285 + $0xd0] sm:$0xff]
        %v360 = vld [vmem:[%s285 + $0xd8] sm:$0xff]
        %v361 = vld [vmem:[%s285 + $0xe0] sm:$0xff]
        %v362 = vld [vmem:[%s285 + $0xe8] sm:$0xff]
        %v363 = vld [vmem:[%s285 + $0xf0] sm:$0xff]
        %v364 = vld [vmem:[%s285 + $0xf8] sm:$0xff]
        %v365 = vpack.c.bf16 %v335, %v333
        %v366 = vpack.c.bf16 %v336, %v334
        %v367 = vpack.c.bf16 %v339, %v337
        %v368 = vpack.c.bf16 %v340, %v338
        %v369 = vpack.c.bf16 %v343, %v341
        %v370 = vpack.c.bf16 %v344, %v342
        %v371 = vpack.c.bf16 %v347, %v345
        %v372 = vpack.c.bf16 %v348, %v346
        %v373 = vpack.c.bf16 %v351, %v349
        %v374 = vpack.c.bf16 %v352, %v350
        %v375 = vpack.c.bf16 %v355, %v353
        %v376 = vpack.c.bf16 %v356, %v354
        %v377 = vpack.c.bf16 %v359, %v357
        %v378 = vpack.c.bf16 %v360, %v358
        %v379 = vpack.c.bf16 %v363, %v361
        %v380 = vpack.c.bf16 %v364, %v362
        %v381 = vld [vmem:[#allocation5] sm:$0xf]
        %v382 = vld [vmem:[#allocation5 + $0x4] sm:$0xf]
        %v383 = vld [vmem:[#allocation5 + $0x8] sm:$0xf]
        %v384 = vld [vmem:[#allocation5 + $0xc] sm:$0xf]
        %v385 = vld [vmem:[#allocation5 + $0x10] sm:$0xf]
        %v386 = vld [vmem:[#allocation5 + $0x14] sm:$0xf]
        %v387 = vld [vmem:[#allocation5 + $0x18] sm:$0xf]
        %v388 = vld [vmem:[#allocation5 + $0x1c] sm:$0xf]
        %v389 = vld [vmem:[#allocation5 + $0x20] sm:$0xf]
        %v390 = vld [vmem:[#allocation5 + $0x24] sm:$0xf]
        %v391 = vld [vmem:[#allocation5 + $0x28] sm:$0xf]
        %v392 = vld [vmem:[#allocation5 + $0x2c] sm:$0xf]
        %v393 = vld [vmem:[#allocation5 + $0x30] sm:$0xf]
        %v394 = vld [vmem:[#allocation5 + $0x34] sm:$0xf]
        %v395 = vld [vmem:[#allocation5 + $0x38] sm:$0xf]
        %v396 = vld [vmem:[#allocation5 + $0x3c] sm:$0xf]
        %v397 = vld [vmem:[#allocation5 + $0x40] sm:$0xf]
        %v398 = vld [vmem:[#allocation5 + $0x44] sm:$0xf]
        %v399 = vld [vmem:[#allocation5 + $0x48] sm:$0xf]
        %v400 = vld [vmem:[#allocation5 + $0x4c] sm:$0xf]
        %v401 = vld [vmem:[#allocation5 + $0x50] sm:$0xf]
        %v402 = vld [vmem:[#allocation5 + $0x54] sm:$0xf]
        %v403 = vld [vmem:[#allocation5 + $0x58] sm:$0xf]
        %v404 = vld [vmem:[#allocation5 + $0x5c] sm:$0xf]
        %v405 = vld [vmem:[#allocation5 + $0x60] sm:$0xf]
        %v406 = vld [vmem:[#allocation5 + $0x64] sm:$0xf]
        %v407 = vld [vmem:[#allocation5 + $0x68] sm:$0xf]
        %v408 = vld [vmem:[#allocation5 + $0x6c] sm:$0xf]
        %v409 = vld [vmem:[#allocation5 + $0x70] sm:$0xf]
        %v410 = vld [vmem:[#allocation5 + $0x74] sm:$0xf]
        %v411 = vld [vmem:[#allocation5 + $0x78] sm:$0xf]
        %v412 = vld [vmem:[#allocation5 + $0x7c] sm:$0xf]
        %v413 = vld [vmem:[%s2] sm:$0x1]
        %v415 = vlaneseq
        %v416 = vshrl.u32 %v415, 7
        %v417 = vsub.s32 0, %v416
        %v418 = vrot.slane %v413, %v417
        %v452 = vunpack.c.l.b16 %v381
        %v453 = vunpack.c.l.b16 %v382
        %v454 = vunpack.c.l.b16 %v383
        %v455 = vunpack.c.l.b16 %v384
        %v456 = vunpack.c.l.b16 %v385
        %v457 = vunpack.c.l.b16 %v386
        %v458 = vunpack.c.l.b16 %v387
        %v459 = vunpack.c.l.b16 %v388
        %v460 = vunpack.c.l.b16 %v389
        %v461 = vunpack.c.l.b16 %v390
        %v462 = vunpack.c.l.b16 %v391
        %v463 = vunpack.c.l.b16 %v392
        %v464 = vunpack.c.l.b16 %v393
        %v465 = vunpack.c.l.b16 %v394
        %v466 = vunpack.c.l.b16 %v395
        %v467 = vunpack.c.l.b16 %v396
        %v468 = vunpack.c.l.b16 %v397
        %v469 = vunpack.c.l.b16 %v398
        %v470 = vunpack.c.l.b16 %v399
        %v471 = vunpack.c.l.b16 %v400
        %v472 = vunpack.c.l.b16 %v401
        %v473 = vunpack.c.l.b16 %v402
        %v474 = vunpack.c.l.b16 %v403
        %v475 = vunpack.c.l.b16 %v404
        %v476 = vunpack.c.l.b16 %v405
        %v477 = vunpack.c.l.b16 %v406
        %v478 = vunpack.c.l.b16 %v407
        %v479 = vunpack.c.l.b16 %v408
        %v480 = vunpack.c.l.b16 %v409
        %v481 = vunpack.c.l.b16 %v410
        %v482 = vunpack.c.l.b16 %v411
        %v483 = vunpack.c.l.b16 %v412
        %v484 = vpack.c.b16 %v453, %v452
        %v485 = vpack.c.b16 %v455, %v454
        %v486 = vpack.c.b16 %v457, %v456
        %v487 = vpack.c.b16 %v459, %v458
        %v488 = vpack.c.b16 %v461, %v460
        %v489 = vpack.c.b16 %v463, %v462
        %v490 = vpack.c.b16 %v465, %v464
        %v491 = vpack.c.b16 %v467, %v466
        %v492 = vpack.c.b16 %v469, %v468
        %v493 = vpack.c.b16 %v471, %v470
        %v494 = vpack.c.b16 %v473, %v472
        %v495 = vpack.c.b16 %v475, %v474
        %v496 = vpack.c.b16 %v477, %v476
        %v497 = vpack.c.b16 %v479, %v478
        %v498 = vpack.c.b16 %v481, %v480
        %v499 = vpack.c.b16 %v483, %v482
        %516 = vmatprep.subr.bf16.mxu0 0
        %517 = vmatpush1.bf16.msra.mxu0 %v491
        %518 = vmatprep.subr.bf16.mxu0 0
        %519 = vmatpush1.bf16.msra.mxu0 %v490
        %520 = vmatprep.subr.bf16.mxu0 0
        %521 = vmatpush1.bf16.msra.mxu0 %v489
        %522 = vmatprep.subr.bf16.mxu0 0
        %523 = vmatpush1.bf16.msra.mxu0 %v488
        %524 = vmatprep.subr.bf16.mxu0 0
        %525 = vmatpush1.bf16.msra.mxu0 %v487
        %526 = vmatprep.subr.bf16.mxu0 0
        %527 = vmatpush1.bf16.msra.mxu0 %v486
        %528 = vmatprep.subr.bf16.mxu0 0
        %529 = vmatpush1.bf16.msra.mxu0 %v485
        %530 = vmatprep.subr.bf16.mxu0 0
        %531 = vmatpush1.bf16.msra.mxu0 %v484
        %532 = vmatprep.subr.bf16.mxu0 0
        %533 = vmatpush2.bf16.msra.mxu0 %v499
        %534 = vmatprep.subr.bf16.mxu0 0
        %535 = vmatpush2.bf16.msra.mxu0 %v498
        %536 = vmatprep.subr.bf16.mxu0 0
        %537 = vmatpush2.bf16.msra.mxu0 %v497
        %538 = vmatprep.subr.bf16.mxu0 0
        %539 = vmatpush2.bf16.msra.mxu0 %v496
        %540 = vmatprep.subr.bf16.mxu0 0
        %541 = vmatpush2.bf16.msra.mxu0 %v495
        %542 = vmatprep.subr.bf16.mxu0 0
        %543 = vmatpush2.bf16.msra.mxu0 %v494
        %544 = vmatprep.subr.bf16.mxu0 0
        %545 = vmatpush2.bf16.msra.mxu0 %v493
        %546 = vmatprep.subr.bf16.mxu0 0
        %547 = vmatpush2.bf16.msra.mxu0 %v492
        %548 = vmatprep.mubr.bf16.mxu0 %v366
        %549 = vmatmul.mubr.bf16.gmra.mxu0 %v365
        %v550 = vpop.f32.mrf.mxu0
        %v551 = vadd.f32 %v418, %v550
        %v552 = vpop.f32.mrf.mxu0
        %v553 = vpop.f32.mrf.mxu0
        %v554 = vadd.f32 %v418, %v553
        %v555 = vpop.f32.mrf.mxu0
        %556 = vmatprep.mubr.bf16.mxu0 %v368
        %557 = vmatmul.mubr.bf16.gmra.mxu0 %v367
        %v558 = vpop.f32.mrf.mxu0
        %v559 = vadd.f32 %v418, %v558
        %v560 = vpop.f32.mrf.mxu0
        %v561 = vpop.f32.mrf.mxu0
        %v562 = vadd.f32 %v418, %v561
        %v563 = vpop.f32.mrf.mxu0
        %564 = vmatprep.mubr.bf16.mxu0 %v370
        %565 = vmatmul.mubr.bf16.gmra.mxu0 %v369
        %v566 = vpop.f32.mrf.mxu0
        %v567 = vadd.f32 %v418, %v566
        %v568 = vpop.f32.mrf.mxu0
        %v569 = vpop.f32.mrf.mxu0
        %v570 = vadd.f32 %v418, %v569
        %v571 = vpop.f32.mrf.mxu0
        %572 = vmatprep.mubr.bf16.mxu0 %v372
        %573 = vmatmul.mubr.bf16.gmra.mxu0 %v371
        %v574 = vpop.f32.mrf.mxu0
        %v575 = vadd.f32 %v418, %v574
        %v576 = vpop.f32.mrf.mxu0
        %v577 = vpop.f32.mrf.mxu0
        %v578 = vadd.f32 %v418, %v577
        %v579 = vpop.f32.mrf.mxu0
        %580 = vmatprep.mubr.bf16.mxu0 %v374
        %581 = vmatmul.mubr.bf16.gmra.mxu0 %v373
        %v582 = vpop.f32.mrf.mxu0
        %v583 = vadd.f32 %v418, %v582
        %v584 = vpop.f32.mrf.mxu0
        %v585 = vpop.f32.mrf.mxu0
        %v586 = vadd.f32 %v418, %v585
        %v587 = vpop.f32.mrf.mxu0
        %588 = vmatprep.mubr.bf16.mxu0 %v376
        %589 = vmatmul.mubr.bf16.gmra.mxu0 %v375
        %v590 = vpop.f32.mrf.mxu0
        %v591 = vadd.f32 %v418, %v590
        %v592 = vpop.f32.mrf.mxu0
        %v593 = vpop.f32.mrf.mxu0
        %v594 = vadd.f32 %v418, %v593
        %v595 = vpop.f32.mrf.mxu0
        %596 = vmatprep.mubr.bf16.mxu0 %v378
        %597 = vmatmul.mubr.bf16.gmra.mxu0 %v377
        %v598 = vpop.f32.mrf.mxu0
        %v599 = vadd.f32 %v418, %v598
        %v600 = vpop.f32.mrf.mxu0
        %v601 = vpop.f32.mrf.mxu0
        %v602 = vadd.f32 %v418, %v601
        %v603 = vpop.f32.mrf.mxu0
        %604 = vmatprep.mubr.bf16.mxu0 %v380
        %605 = vmatmul.mubr.bf16.gmra.mxu0 %v379
        %v606 = vpop.f32.mrf.mxu0
        %v607 = vadd.f32 %v418, %v606
        %v608 = vpop.f32.mrf.mxu0
        %v609 = vpop.f32.mrf.mxu0
        %v610 = vadd.f32 %v418, %v609
        %v611 = vpop.f32.mrf.mxu0
        %612 = vdwg.mxu0
        %v613 = vmax.f32 %v551, 0.0
        %v614 = vmax.f32 %v554, 0.0
        %v615 = vmax.f32 %v559, 0.0
        %v616 = vmax.f32 %v562, 0.0
        %v617 = vmax.f32 %v567, 0.0
        %v618 = vmax.f32 %v570, 0.0
        %v619 = vmax.f32 %v575, 0.0
        %v620 = vmax.f32 %v578, 0.0
        %v621 = vmax.f32 %v583, 0.0
        %v622 = vmax.f32 %v586, 0.0
        %v623 = vmax.f32 %v591, 0.0
        %v624 = vmax.f32 %v594, 0.0
        %v625 = vmax.f32 %v599, 0.0
        %v626 = vmax.f32 %v602, 0.0
        %v627 = vmax.f32 %v607, 0.0
        %v628 = vmax.f32 %v610, 0.0
        %v629 = vpack.c.bf16 %v614, %v613
        %v630 = vpack.c.bf16 %v616, %v615
        %v631 = vpack.c.bf16 %v618, %v617
        %v632 = vpack.c.bf16 %v620, %v619
        %v633 = vpack.c.bf16 %v622, %v621
        %v634 = vpack.c.bf16 %v624, %v623
        %v635 = vpack.c.bf16 %v626, %v625
        %v636 = vpack.c.bf16 %v628, %v627
        %v637 = vld [vmem:[%s3] sm:$0xf]
        %v638 = vld [vmem:[%s3 + $0x4] sm:$0xf]
        %v639 = vld [vmem:[%s3 + $0x8] sm:$0xf]
        %v640 = vld [vmem:[%s3 + $0xc] sm:$0xf]
        %v641 = vld [vmem:[%s3 + $0x10] sm:$0xf]
        %v642 = vld [vmem:[%s3 + $0x14] sm:$0xf]
        %v643 = vld [vmem:[%s3 + $0x18] sm:$0xf]
        %v644 = vld [vmem:[%s3 + $0x1c] sm:$0xf]
        %v645 = vld [vmem:[%s3 + $0x20] sm:$0xf]
        %v646 = vld [vmem:[%s3 + $0x24] sm:$0xf]
        %v647 = vld [vmem:[%s3 + $0x28] sm:$0xf]
        %v648 = vld [vmem:[%s3 + $0x2c] sm:$0xf]
        %v649 = vld [vmem:[%s3 + $0x30] sm:$0xf]
        %v650 = vld [vmem:[%s3 + $0x34] sm:$0xf]
        %v651 = vld [vmem:[%s3 + $0x38] sm:$0xf]
        %v652 = vld [vmem:[%s3 + $0x3c] sm:$0xf]
        %v653 = vld [vmem:[%s4] sm:$0x1]
        %v655 = vlaneseq
        %v656 = vshrl.u32 %v655, 7
        %v657 = vsub.s32 0, %v656
        %v658 = vrot.slane %v653, %v657
        %v676 = vunpack.c.l.b16 %v637
        %v677 = vunpack.c.l.b16 %v638
        %v678 = vunpack.c.l.b16 %v639
        %v679 = vunpack.c.l.b16 %v640
        %v680 = vunpack.c.l.b16 %v641
        %v681 = vunpack.c.l.b16 %v642
        %v682 = vunpack.c.l.b16 %v643
        %v683 = vunpack.c.l.b16 %v644
        %v684 = vunpack.c.l.b16 %v645
        %v685 = vunpack.c.l.b16 %v646
        %v686 = vunpack.c.l.b16 %v647
        %v687 = vunpack.c.l.b16 %v648
        %v688 = vunpack.c.l.b16 %v649
        %v689 = vunpack.c.l.b16 %v650
        %v690 = vunpack.c.l.b16 %v651
        %v691 = vunpack.c.l.b16 %v652
        %v692 = vpack.c.b16 %v677, %v676
        %v693 = vpack.c.b16 %v679, %v678
        %v694 = vpack.c.b16 %v681, %v680
        %v695 = vpack.c.b16 %v683, %v682
        %v696 = vpack.c.b16 %v685, %v684
        %v697 = vpack.c.b16 %v687, %v686
        %v698 = vpack.c.b16 %v689, %v688
        %v699 = vpack.c.b16 %v691, %v690
        %708 = vmatprep.subr.bf16.mxu0 0
        %709 = vmatpush1.bf16.msra.mxu0 %v699
        %710 = vmatprep.subr.bf16.mxu0 0
        %711 = vmatpush1.bf16.msra.mxu0 %v698
        %712 = vmatprep.subr.bf16.mxu0 0
        %713 = vmatpush1.bf16.msra.mxu0 %v697
        %714 = vmatprep.subr.bf16.mxu0 0
        %715 = vmatpush1.bf16.msra.mxu0 %v696
        %716 = vmatprep.subr.bf16.mxu0 0
        %717 = vmatpush1.bf16.msra.mxu0 %v695
        %718 = vmatprep.subr.bf16.mxu0 0
        %719 = vmatpush1.bf16.msra.mxu0 %v694
        %720 = vmatprep.subr.bf16.mxu0 0
        %721 = vmatpush1.bf16.msra.mxu0 %v693
        %722 = vmatprep.subr.bf16.mxu0 0
        %723 = vmatpush1.bf16.msra.mxu0 %v692
        %724 = vmatprep.subr.bf16.mxu0 0
        %725 = vmatpush2.bf16.msra.mxu0 0
        %726 = vmatprep.subr.bf16.mxu0 0
        %727 = vmatpush2.bf16.msra.mxu0 0
        %728 = vmatprep.subr.bf16.mxu0 0
        %729 = vmatpush2.bf16.msra.mxu0 0
        %730 = vmatprep.subr.bf16.mxu0 0
        %731 = vmatpush2.bf16.msra.mxu0 0
        %732 = vmatprep.subr.bf16.mxu0 0
        %733 = vmatpush2.bf16.msra.mxu0 0
        %734 = vmatprep.subr.bf16.mxu0 0
        %735 = vmatpush2.bf16.msra.mxu0 0
        %736 = vmatprep.subr.bf16.mxu0 0
        %737 = vmatpush2.bf16.msra.mxu0 0
        %738 = vmatprep.subr.bf16.mxu0 0
        %739 = vmatpush2.bf16.msra.mxu0 0
        %740 = vmatprep.mubr.bf16.mxu0 0
        %741 = vmatmul.mubr.bf16.gmra.mxu0 %v629
        %v742 = vpop.f32.mrf.mxu0
        %v743 = vadd.f32 %v658, %v742
        %v744 = vpop.f32.mrf.mxu0
        %v745 = vpop.f32.mrf.mxu0
        %v746 = vadd.f32 %v658, %v745
        %v747 = vpop.f32.mrf.mxu0
        %748 = vmatprep.mubr.bf16.mxu0 0
        %749 = vmatmul.mubr.bf16.gmra.mxu0 %v630
        %v750 = vpop.f32.mrf.mxu0
        %v751 = vadd.f32 %v658, %v750
        %v752 = vpop.f32.mrf.mxu0
        %v753 = vpop.f32.mrf.mxu0
        %v754 = vadd.f32 %v658, %v753
        %v755 = vpop.f32.mrf.mxu0
        %756 = vmatprep.mubr.bf16.mxu0 0
        %757 = vmatmul.mubr.bf16.gmra.mxu0 %v631
        %v758 = vpop.f32.mrf.mxu0
        %v759 = vadd.f32 %v658, %v758
        %v760 = vpop.f32.mrf.mxu0
        %v761 = vpop.f32.mrf.mxu0
        %v762 = vadd.f32 %v658, %v761
        %v763 = vpop.f32.mrf.mxu0
        %764 = vmatprep.mubr.bf16.mxu0 0
        %765 = vmatmul.mubr.bf16.gmra.mxu0 %v632
        %v766 = vpop.f32.mrf.mxu0
        %v767 = vadd.f32 %v658, %v766
        %v768 = vpop.f32.mrf.mxu0
        %v769 = vpop.f32.mrf.mxu0
        %v770 = vadd.f32 %v658, %v769
        %v771 = vpop.f32.mrf.mxu0
        %772 = vmatprep.mubr.bf16.mxu0 0
        %773 = vmatmul.mubr.bf16.gmra.mxu0 %v633
        %v774 = vpop.f32.mrf.mxu0
        %v775 = vadd.f32 %v658, %v774
        %v776 = vpop.f32.mrf.mxu0
        %v777 = vpop.f32.mrf.mxu0
        %v778 = vadd.f32 %v658, %v777
        %v779 = vpop.f32.mrf.mxu0
        %780 = vmatprep.mubr.bf16.mxu0 0
        %781 = vmatmul.mubr.bf16.gmra.mxu0 %v634
        %v782 = vpop.f32.mrf.mxu0
        %v783 = vadd.f32 %v658, %v782
        %v784 = vpop.f32.mrf.mxu0
        %v785 = vpop.f32.mrf.mxu0
        %v786 = vadd.f32 %v658, %v785
        %v787 = vpop.f32.mrf.mxu0
        %788 = vmatprep.mubr.bf16.mxu0 0
        %789 = vmatmul.mubr.bf16.gmra.mxu0 %v635
        %v790 = vpop.f32.mrf.mxu0
        %v791 = vadd.f32 %v658, %v790
        %v792 = vpop.f32.mrf.mxu0
        %v793 = vpop.f32.mrf.mxu0
        %v794 = vadd.f32 %v658, %v793
        %v795 = vpop.f32.mrf.mxu0
        %796 = vmatprep.mubr.bf16.mxu0 0
        %797 = vmatmul.mubr.bf16.gmra.mxu0 %v636
        %v798 = vpop.f32.mrf.mxu0
        %v799 = vadd.f32 %v658, %v798
        %v800 = vpop.f32.mrf.mxu0
        %v801 = vpop.f32.mrf.mxu0
        %v802 = vadd.f32 %v658, %v801
        %v803 = vpop.f32.mrf.mxu0
        %804 = vdwg.mxu0
        %v805 = vmax.f32 %v743, 0.0
        %v806 = vmax.f32 %v746, 0.0
        %v807 = vmax.f32 %v751, 0.0
        %v808 = vmax.f32 %v754, 0.0
        %v809 = vmax.f32 %v759, 0.0
        %v810 = vmax.f32 %v762, 0.0
        %v811 = vmax.f32 %v767, 0.0
        %v812 = vmax.f32 %v770, 0.0
        %v813 = vmax.f32 %v775, 0.0
        %v814 = vmax.f32 %v778, 0.0
        %v815 = vmax.f32 %v783, 0.0
        %v816 = vmax.f32 %v786, 0.0
        %v817 = vmax.f32 %v791, 0.0
        %v818 = vmax.f32 %v794, 0.0
        %v819 = vmax.f32 %v799, 0.0
        %v820 = vmax.f32 %v802, 0.0
        %v821 = vpack.c.bf16 %v806, %v805
        %v822 = vpack.c.bf16 %v808, %v807
        %v823 = vpack.c.bf16 %v810, %v809
        %v824 = vpack.c.bf16 %v812, %v811
        %v825 = vpack.c.bf16 %v814, %v813
        %v826 = vpack.c.bf16 %v816, %v815
        %v827 = vpack.c.bf16 %v818, %v817
        %v828 = vpack.c.bf16 %v820, %v819
        %v829 = vld [vmem:[%s5] sm:$0xff]
        %v830 = vld [vmem:[%s5 + $0x8] sm:$0xff]
        %v831 = vld [vmem:[%s5 + $0x10] sm:$0xff]
        %v832 = vld [vmem:[%s5 + $0x18] sm:$0xff]
        %v833 = vld [vmem:[%s5 + $0x20] sm:$0xff]
        %v834 = vld [vmem:[%s5 + $0x28] sm:$0xff]
        %v835 = vld [vmem:[%s5 + $0x30] sm:$0xff]
        %v836 = vld [vmem:[%s5 + $0x38] sm:$0xff]
        %v837 = vld [vmem:[%s6] sm:$0x3]
        %v839 = vlaneseq
        %v840 = vshrl.u32 %v839, 7
        %v841 = vsub.s32 0, %v840
        %v842 = vrot.slane %v837, %v841
        %v843 = vlaneseq
        %v844 = vshrl.u32 %v843, 7
        %v845 = vsub.s32 1, %v844
        %v846 = vrot.slane %v837, %v845
        %v857 = vunpack.c.l.b16 %v829
        %v858 = vunpack.c.h.b16 %v829
        %v859 = vunpack.c.l.b16 %v830
        %v860 = vunpack.c.h.b16 %v830
        %v861 = vunpack.c.l.b16 %v831
        %v862 = vunpack.c.h.b16 %v831
        %v863 = vunpack.c.l.b16 %v832
        %v864 = vunpack.c.h.b16 %v832
        %v865 = vunpack.c.l.b16 %v833
        %v866 = vunpack.c.h.b16 %v833
        %v867 = vunpack.c.l.b16 %v834
        %v868 = vunpack.c.h.b16 %v834
        %v869 = vunpack.c.l.b16 %v835
        %v870 = vunpack.c.h.b16 %v835
        %v871 = vunpack.c.l.b16 %v836
        %v872 = vunpack.c.h.b16 %v836
        %v873 = vpack.c.b16 %v859, %v857
        %v874 = vpack.c.b16 %v860, %v858
        %v875 = vpack.c.b16 %v863, %v861
        %v876 = vpack.c.b16 %v864, %v862
        %v877 = vpack.c.b16 %v867, %v865
        %v878 = vpack.c.b16 %v868, %v866
        %v879 = vpack.c.b16 %v871, %v869
        %v880 = vpack.c.b16 %v872, %v870
        %vm889 = vcmask 523264
        %v891 = vsel %vm889, %v821, 0
        %v894 = vsel %vm889, %v822, 0
        %v897 = vsel %vm889, %v823, 0
        %v900 = vsel %vm889, %v824, 0
        %v903 = vsel %vm889, %v825, 0
        %v906 = vsel %vm889, %v826, 0
        %v909 = vsel %vm889, %v827, 0
        %v912 = vsel %vm889, %v828, 0
        %914 = vmatprep.subr.bf16.mxu0 0
        %915 = vmatpush1.bf16.msra.mxu0 0
        %916 = vmatprep.subr.bf16.mxu0 0
        %917 = vmatpush1.bf16.msra.mxu0 0
        %918 = vmatprep.subr.bf16.mxu0 0
        %919 = vmatpush1.bf16.msra.mxu0 0
        %920 = vmatprep.subr.bf16.mxu0 0
        %921 = vmatpush1.bf16.msra.mxu0 0
        %922 = vmatprep.subr.bf16.mxu0 %v880
        %923 = vmatpush1.bf16.msra.mxu0 %v879
        %924 = vmatprep.subr.bf16.mxu0 %v878
        %925 = vmatpush1.bf16.msra.mxu0 %v877
        %926 = vmatprep.subr.bf16.mxu0 %v876
        %927 = vmatpush1.bf16.msra.mxu0 %v875
        %928 = vmatprep.subr.bf16.mxu0 %v874
        %929 = vmatpush1.bf16.msra.mxu0 %v873
        %930 = vmatprep.subr.bf16.mxu0 0
        %931 = vmatpush2.bf16.msra.mxu0 0
        %932 = vmatprep.subr.bf16.mxu0 0
        %933 = vmatpush2.bf16.msra.mxu0 0
        %934 = vmatprep.subr.bf16.mxu0 0
        %935 = vmatpush2.bf16.msra.mxu0 0
        %936 = vmatprep.subr.bf16.mxu0 0
        %937 = vmatpush2.bf16.msra.mxu0 0
        %938 = vmatprep.subr.bf16.mxu0 0
        %939 = vmatpush2.bf16.msra.mxu0 0
        %940 = vmatprep.subr.bf16.mxu0 0
        %941 = vmatpush2.bf16.msra.mxu0 0
        %942 = vmatprep.subr.bf16.mxu0 0
        %943 = vmatpush2.bf16.msra.mxu0 0
        %944 = vmatprep.subr.bf16.mxu0 0
        %945 = vmatpush2.bf16.msra.mxu0 0
        %946 = vmatprep.mubr.bf16.mxu0 0
        %947 = vmatmul.mubr.bf16.gmra.mxu0 %v891
        %v948 = vpop.f32.mrf.mxu0
        %v949 = vadd.f32 %v842, %v948
        %v950 = vpop.f32.mrf.mxu0
        %v951 = vadd.f32 %v846, %v950
        %v952 = vpop.f32.mrf.mxu0
        %v953 = vadd.f32 %v842, %v952
        %v954 = vpop.f32.mrf.mxu0
        %v955 = vadd.f32 %v846, %v954
        %956 = vmatprep.mubr.bf16.mxu0 0
        %957 = vmatmul.mubr.bf16.gmra.mxu0 %v894
        %v958 = vpop.f32.mrf.mxu0
        %v959 = vadd.f32 %v842, %v958
        %v960 = vpop.f32.mrf.mxu0
        %v961 = vadd.f32 %v846, %v960
        %v962 = vpop.f32.mrf.mxu0
        %v963 = vadd.f32 %v842, %v962
        %v964 = vpop.f32.mrf.mxu0
        %v965 = vadd.f32 %v846, %v964
        %966 = vmatprep.mubr.bf16.mxu0 0
        %967 = vmatmul.mubr.bf16.gmra.mxu0 %v897
        %v968 = vpop.f32.mrf.mxu0
        %v969 = vadd.f32 %v842, %v968
        %v970 = vpop.f32.mrf.mxu0
        %v971 = vadd.f32 %v846, %v970
        %v972 = vpop.f32.mrf.mxu0
        %v973 = vadd.f32 %v842, %v972
        %v974 = vpop.f32.mrf.mxu0
        %v975 = vadd.f32 %v846, %v974
        %976 = vmatprep.mubr.bf16.mxu0 0
        %977 = vmatmul.mubr.bf16.gmra.mxu0 %v900
        %v978 = vpop.f32.mrf.mxu0
        %v979 = vadd.f32 %v842, %v978
        %v980 = vpop.f32.mrf.mxu0
        %v981 = vadd.f32 %v846, %v980
        %v982 = vpop.f32.mrf.mxu0
        %v983 = vadd.f32 %v842, %v982
        %v984 = vpop.f32.mrf.mxu0
        %v985 = vadd.f32 %v846, %v984
        %986 = vmatprep.mubr.bf16.mxu0 0
        %987 = vmatmul.mubr.bf16.gmra.mxu0 %v903
        %v988 = vpop.f32.mrf.mxu0
        %v989 = vadd.f32 %v842, %v988
        %v990 = vpop.f32.mrf.mxu0
        %v991 = vadd.f32 %v846, %v990
        %v992 = vpop.f32.mrf.mxu0
        %v993 = vadd.f32 %v842, %v992
        %v994 = vpop.f32.mrf.mxu0
        %v995 = vadd.f32 %v846, %v994
        %996 = vmatprep.mubr.bf16.mxu0 0
        %997 = vmatmul.mubr.bf16.gmra.mxu0 %v906
        %v998 = vpop.f32.mrf.mxu0
        %v999 = vadd.f32 %v842, %v998
        %v1000 = vpop.f32.mrf.mxu0
        %v1001 = vadd.f32 %v846, %v1000
        %v1002 = vpop.f32.mrf.mxu0
        %v1003 = vadd.f32 %v842, %v1002
        %v1004 = vpop.f32.mrf.mxu0
        %v1005 = vadd.f32 %v846, %v1004
        %1006 = vmatprep.mubr.bf16.mxu0 0
        %1007 = vmatmul.mubr.bf16.gmra.mxu0 %v909
        %v1008 = vpop.f32.mrf.mxu0
        %v1009 = vadd.f32 %v842, %v1008
        %v1010 = vpop.f32.mrf.mxu0
        %v1011 = vadd.f32 %v846, %v1010
        %v1012 = vpop.f32.mrf.mxu0
        %v1013 = vadd.f32 %v842, %v1012
        %v1014 = vpop.f32.mrf.mxu0
        %v1015 = vadd.f32 %v846, %v1014
        %1016 = vmatprep.mubr.bf16.mxu0 0
        %1017 = vmatmul.mubr.bf16.gmra.mxu0 %v912
        %v1018 = vpop.f32.mrf.mxu0
        %v1019 = vadd.f32 %v842, %v1018
        %v1020 = vpop.f32.mrf.mxu0
        %v1021 = vadd.f32 %v846, %v1020
        %v1022 = vpop.f32.mrf.mxu0
        %v1023 = vadd.f32 %v842, %v1022
        %v1024 = vpop.f32.mrf.mxu0
        %v1025 = vadd.f32 %v846, %v1024
        %1026 = vdwg.mxu0
        %v1027 = vxor.u32 %v949, 2147483648
        %v1028 = vxor.u32 %v951, 2147483648
        %v1029 = vxor.u32 %v953, 2147483648
        %v1030 = vxor.u32 %v955, 2147483648
        %v1031 = vxor.u32 %v959, 2147483648
        %v1032 = vxor.u32 %v961, 2147483648
        %v1033 = vxor.u32 %v963, 2147483648
        %v1034 = vxor.u32 %v965, 2147483648
        %v1035 = vxor.u32 %v969, 2147483648
        %v1036 = vxor.u32 %v971, 2147483648
        %v1037 = vxor.u32 %v973, 2147483648
        %v1038 = vxor.u32 %v975, 2147483648
        %v1039 = vxor.u32 %v979, 2147483648
        %v1040 = vxor.u32 %v981, 2147483648
        %v1041 = vxor.u32 %v983, 2147483648
        %v1042 = vxor.u32 %v985, 2147483648
        %v1043 = vxor.u32 %v989, 2147483648
        %v1044 = vxor.u32 %v991, 2147483648
        %v1045 = vxor.u32 %v993, 2147483648
        %v1046 = vxor.u32 %v995, 2147483648
        %v1047 = vxor.u32 %v999, 2147483648
        %v1048 = vxor.u32 %v1001, 2147483648
        %v1049 = vxor.u32 %v1003, 2147483648
        %v1050 = vxor.u32 %v1005, 2147483648
        %v1051 = vxor.u32 %v1009, 2147483648
        %v1052 = vxor.u32 %v1011, 2147483648
        %v1053 = vxor.u32 %v1013, 2147483648
        %v1054 = vxor.u32 %v1015, 2147483648
        %v1055 = vxor.u32 %v1019, 2147483648
        %v1056 = vxor.u32 %v1021, 2147483648
        %v1057 = vxor.u32 %v1023, 2147483648
        %v1058 = vxor.u32 %v1025, 2147483648
        %v1059 = vmul.f32 %v1027, 1.442695
        %v1060 = vpow.pop %v1059
        %v1061 = vmul.f32 %v1028, 1.442695
        %v1062 = vpow.pop %v1061
        %v1063 = vmul.f32 %v1029, 1.442695
        %v1064 = vpow.pop %v1063
        %v1065 = vmul.f32 %v1030, 1.442695
        %v1066 = vpow.pop %v1065
        %v1067 = vmul.f32 %v1031, 1.442695
        %v1068 = vpow.pop %v1067
        %v1069 = vmul.f32 %v1032, 1.442695
        %v1070 = vpow.pop %v1069
        %v1071 = vmul.f32 %v1033, 1.442695
        %v1072 = vpow.pop %v1071
        %v1073 = vmul.f32 %v1034, 1.442695
        %v1074 = vpow.pop %v1073
        %v1075 = vmul.f32 %v1035, 1.442695
        %v1076 = vpow.pop %v1075
        %v1077 = vmul.f32 %v1036, 1.442695
        %v1078 = vpow.pop %v1077
        %v1079 = vmul.f32 %v1037, 1.442695
        %v1080 = vpow.pop %v1079
        %v1081 = vmul.f32 %v1038, 1.442695
        %v1082 = vpow.pop %v1081
        %v1083 = vmul.f32 %v1039, 1.442695
        %v1084 = vpow.pop %v1083
        %v1085 = vmul.f32 %v1040, 1.442695
        %v1086 = vpow.pop %v1085
        %v1087 = vmul.f32 %v1041, 1.442695
        %v1088 = vpow.pop %v1087
        %v1089 = vmul.f32 %v1042, 1.442695
        %v1090 = vpow.pop %v1089
        %v1091 = vmul.f32 %v1043, 1.442695
        %v1092 = vpow.pop %v1091
        %v1093 = vmul.f32 %v1044, 1.442695
        %v1094 = vpow.pop %v1093
        %v1095 = vmul.f32 %v1045, 1.442695
        %v1096 = vpow.pop %v1095
        %v1097 = vmul.f32 %v1046, 1.442695
        %v1098 = vpow.pop %v1097
        %v1099 = vmul.f32 %v1047, 1.442695
        %v1100 = vpow.pop %v1099
        %v1101 = vmul.f32 %v1048, 1.442695
        %v1102 = vpow.pop %v1101
        %v1103 = vmul.f32 %v1049, 1.442695
        %v1104 = vpow.pop %v1103
        %v1105 = vmul.f32 %v1050, 1.442695
        %v1106 = vpow.pop %v1105
        %v1107 = vmul.f32 %v1051, 1.442695
        %v1108 = vpow.pop %v1107
        %v1109 = vmul.f32 %v1052, 1.442695
        %v1110 = vpow.pop %v1109
        %v1111 = vmul.f32 %v1053, 1.442695
        %v1112 = vpow.pop %v1111
        %v1113 = vmul.f32 %v1054, 1.442695
        %v1114 = vpow.pop %v1113
        %v1115 = vmul.f32 %v1055, 1.442695
        %v1116 = vpow.pop %v1115
        %v1117 = vmul.f32 %v1056, 1.442695
        %v1118 = vpow.pop %v1117
        %v1119 = vmul.f32 %v1057, 1.442695
        %v1120 = vpow.pop %v1119
        %v1121 = vmul.f32 %v1058, 1.442695
        %v1122 = vpow.pop %v1121
        %v1123 = vadd.f32 %v1060, 1.0
        %v1124 = vadd.f32 %v1062, 1.0
        %v1125 = vadd.f32 %v1064, 1.0
        %v1126 = vadd.f32 %v1066, 1.0
        %v1127 = vadd.f32 %v1068, 1.0
        %v1128 = vadd.f32 %v1070, 1.0
        %v1129 = vadd.f32 %v1072, 1.0
        %v1130 = vadd.f32 %v1074, 1.0
        %v1131 = vadd.f32 %v1076, 1.0
        %v1132 = vadd.f32 %v1078, 1.0
        %v1133 = vadd.f32 %v1080, 1.0
        %v1134 = vadd.f32 %v1082, 1.0
        %v1135 = vadd.f32 %v1084, 1.0
        %v1136 = vadd.f32 %v1086, 1.0
        %v1137 = vadd.f32 %v1088, 1.0
        %v1138 = vadd.f32 %v1090, 1.0
        %v1139 = vadd.f32 %v1092, 1.0
        %v1140 = vadd.f32 %v1094, 1.0
        %v1141 = vadd.f32 %v1096, 1.0
        %v1142 = vadd.f32 %v1098, 1.0
        %v1143 = vadd.f32 %v1100, 1.0
        %v1144 = vadd.f32 %v1102, 1.0
        %v1145 = vadd.f32 %v1104, 1.0
        %v1146 = vadd.f32 %v1106, 1.0
        %v1147 = vadd.f32 %v1108, 1.0
        %v1148 = vadd.f32 %v1110, 1.0
        %v1149 = vadd.f32 %v1112, 1.0
        %v1150 = vadd.f32 %v1114, 1.0
        %v1151 = vadd.f32 %v1116, 1.0
        %v1152 = vadd.f32 %v1118, 1.0
        %v1153 = vadd.f32 %v1120, 1.0
        %v1154 = vadd.f32 %v1122, 1.0
        %v1155 = vrcp.pop %v1123
        %v1156 = vmul.f32 1.0, %v1155
        %v1157 = vrcp.pop %v1124
        %v1158 = vmul.f32 1.0, %v1157
        %v1159 = vrcp.pop %v1125
        %v1160 = vmul.f32 1.0, %v1159
        %v1161 = vrcp.pop %v1126
        %v1162 = vmul.f32 1.0, %v1161
        %v1163 = vrcp.pop %v1127
        %v1164 = vmul.f32 1.0, %v1163
        %v1165 = vrcp.pop %v1128
        %v1166 = vmul.f32 1.0, %v1165
        %v1167 = vrcp.pop %v1129
        %v1168 = vmul.f32 1.0, %v1167
        %v1169 = vrcp.pop %v1130
        %v1170 = vmul.f32 1.0, %v1169
        %v1171 = vrcp.pop %v1131
        %v1172 = vmul.f32 1.0, %v1171
        %v1173 = vrcp.pop %v1132
        %v1174 = vmul.f32 1.0, %v1173
        %v1175 = vrcp.pop %v1133
        %v1176 = vmul.f32 1.0, %v1175
        %v1177 = vrcp.pop %v1134
        %v1178 = vmul.f32 1.0, %v1177
        %v1179 = vrcp.pop %v1135
        %v1180 = vmul.f32 1.0, %v1179
        %v1181 = vrcp.pop %v1136
        %v1182 = vmul.f32 1.0, %v1181
        %v1183 = vrcp.pop %v1137
        %v1184 = vmul.f32 1.0, %v1183
        %v1185 = vrcp.pop %v1138
        %v1186 = vmul.f32 1.0, %v1185
        %v1187 = vrcp.pop %v1139
        %v1188 = vmul.f32 1.0, %v1187
        %v1189 = vrcp.pop %v1140
        %v1190 = vmul.f32 1.0, %v1189
        %v1191 = vrcp.pop %v1141
        %v1192 = vmul.f32 1.0, %v1191
        %v1193 = vrcp.pop %v1142
        %v1194 = vmul.f32 1.0, %v1193
        %v1195 = vrcp.pop %v1143
        %v1196 = vmul.f32 1.0, %v1195
        %v1197 = vrcp.pop %v1144
        %v1198 = vmul.f32 1.0, %v1197
        %v1199 = vrcp.pop %v1145
        %v1200 = vmul.f32 1.0, %v1199
        %v1201 = vrcp.pop %v1146
        %v1202 = vmul.f32 1.0, %v1201
        %v1203 = vrcp.pop %v1147
        %v1204 = vmul.f32 1.0, %v1203
        %v1205 = vrcp.pop %v1148
        %v1206 = vmul.f32 1.0, %v1205
        %v1207 = vrcp.pop %v1149
        %v1208 = vmul.f32 1.0, %v1207
        %v1209 = vrcp.pop %v1150
        %v1210 = vmul.f32 1.0, %v1209
        %v1211 = vrcp.pop %v1151
        %v1212 = vmul.f32 1.0, %v1211
        %v1213 = vrcp.pop %v1152
        %v1214 = vmul.f32 1.0, %v1213
        %v1215 = vrcp.pop %v1153
        %v1216 = vmul.f32 1.0, %v1215
        %v1217 = vrcp.pop %v1154
        %v1218 = vmul.f32 1.0, %v1217
        %v1219 = vpack.c.bf16 %v1160, %v1156
        %v1220 = vpack.c.bf16 %v1162, %v1158
        %v1221 = vpack.c.bf16 %v1168, %v1164
        %v1222 = vpack.c.bf16 %v1170, %v1166
        %v1223 = vpack.c.bf16 %v1176, %v1172
        %v1224 = vpack.c.bf16 %v1178, %v1174
        %v1225 = vpack.c.bf16 %v1184, %v1180
        %v1226 = vpack.c.bf16 %v1186, %v1182
        %v1227 = vpack.c.bf16 %v1192, %v1188
        %v1228 = vpack.c.bf16 %v1194, %v1190
        %v1229 = vpack.c.bf16 %v1200, %v1196
        %v1230 = vpack.c.bf16 %v1202, %v1198
        %v1231 = vpack.c.bf16 %v1208, %v1204
        %v1232 = vpack.c.bf16 %v1210, %v1206
        %v1233 = vpack.c.bf16 %v1216, %v1212
        %v1234 = vpack.c.bf16 %v1218, %v1214
        %v1251 = vunpack.c.l.b16 %v1219
        %v1252 = vunpack.c.l.b16 %v1220
        %v1253 = vunpack.c.h.b16 %v1219
        %v1254 = vunpack.c.h.b16 %v1220
        %v1255 = vunpack.c.l.b16 %v1221
        %v1256 = vunpack.c.l.b16 %v1222
        %v1257 = vunpack.c.h.b16 %v1221
        %v1258 = vunpack.c.h.b16 %v1222
        %v1259 = vunpack.c.l.b16 %v1223
        %v1260 = vunpack.c.l.b16 %v1224
        %v1261 = vunpack.c.h.b16 %v1223
        %v1262 = vunpack.c.h.b16 %v1224
        %v1263 = vunpack.c.l.b16 %v1225
        %v1264 = vunpack.c.l.b16 %v1226
        %v1265 = vunpack.c.h.b16 %v1225
        %v1266 = vunpack.c.h.b16 %v1226
        %v1267 = vunpack.c.l.b16 %v1227
        %v1268 = vunpack.c.l.b16 %v1228
        %v1269 = vunpack.c.h.b16 %v1227
        %v1270 = vunpack.c.h.b16 %v1228
        %v1271 = vunpack.c.l.b16 %v1229
        %v1272 = vunpack.c.l.b16 %v1230
        %v1273 = vunpack.c.h.b16 %v1229
        %v1274 = vunpack.c.h.b16 %v1230
        %v1275 = vunpack.c.l.b16 %v1231
        %v1276 = vunpack.c.l.b16 %v1232
        %v1277 = vunpack.c.h.b16 %v1231
        %v1278 = vunpack.c.h.b16 %v1232
        %v1279 = vunpack.c.l.b16 %v1233
        %v1280 = vunpack.c.l.b16 %v1234
        %v1281 = vunpack.c.h.b16 %v1233
        %v1282 = vunpack.c.h.b16 %v1234
        %v1283 = vpack.c.b16 %v1252, %v1251
        %v1284 = vpack.c.b16 %v1254, %v1253
        %v1285 = vpack.c.b16 %v1256, %v1255
        %v1286 = vpack.c.b16 %v1258, %v1257
        %v1287 = vpack.c.b16 %v1260, %v1259
        %v1288 = vpack.c.b16 %v1262, %v1261
        %v1289 = vpack.c.b16 %v1264, %v1263
        %v1290 = vpack.c.b16 %v1266, %v1265
        %v1291 = vpack.c.b16 %v1268, %v1267
        %v1292 = vpack.c.b16 %v1270, %v1269
        %v1293 = vpack.c.b16 %v1272, %v1271
        %v1294 = vpack.c.b16 %v1274, %v1273
        %v1295 = vpack.c.b16 %v1276, %v1275
        %v1296 = vpack.c.b16 %v1278, %v1277
        %v1297 = vpack.c.b16 %v1280, %v1279
        %v1298 = vpack.c.b16 %v1282, %v1281
        %1315 = vst [vmem:[%s319] sm:$0xff] %v1283
        %1316 = vst [vmem:[%s319 + $0x8] sm:$0xff] %v1284
        %1317 = vst [vmem:[%s319 + $0x10] sm:$0xff] %v1285
        %1318 = vst [vmem:[%s319 + $0x18] sm:$0xff] %v1286
        %1319 = vst [vmem:[%s319 + $0x20] sm:$0xff] %v1287
        %1320 = vst [vmem:[%s319 + $0x28] sm:$0xff] %v1288
        %1321 = vst [vmem:[%s319 + $0x30] sm:$0xff] %v1289
        %1322 = vst [vmem:[%s319 + $0x38] sm:$0xff] %v1290
        %1323 = vst [vmem:[%s319 + $0x40] sm:$0xff] %v1291
        %1324 = vst [vmem:[%s319 + $0x48] sm:$0xff] %v1292
        %1325 = vst [vmem:[%s319 + $0x50] sm:$0xff] %v1293
        %1326 = vst [vmem:[%s319 + $0x58] sm:$0xff] %v1294
        %1327 = vst [vmem:[%s319 + $0x60] sm:$0xff] %v1295
        %1328 = vst [vmem:[%s319 + $0x68] sm:$0xff] %v1296
        %1329 = vst [vmem:[%s319 + $0x70] sm:$0xff] %v1297
        %1330 = vst [vmem:[%s319 + $0x78] sm:$0xff] %v1298
        %s1331 = sand.u32 %s185, 1
        %s1332 = scalar_lea.sflag [#allocation4], %s1331
        %s1333 = sand.u32 %s185, 1
        %s1334 = smul.addr %s1333, 128
        %s1335 = scalar_lea.vmem [#allocation7], %s1334
        // Predicated region
        $region57: #{tpu_custom_call.1} parent=47 // pred_check
          %p1336 = pneg %p195
        $region58: #{tpu_custom_call.1} parent=47 // pred_check_branch
          %1338 = sbr.rel (%p1336) target = $region60
        $region59: #{tpu_custom_call.1} parent=47 // pred_region
          %s1339 = smul.u32 16, %s25
          %s1340 = ssub.s32 25, %s1339
          %p1341 = scmp.lt.s32.totalorder %s1340, 16
          %s1342 = scalar_select %p1341, %s1340, 16
          %s1343 = smul.u32 64, %s1342
          %s1344 = smul.u32 %s1343, 2
          %s1346 = ssub.s32 2048, %s1344
          %1347 = vsyncadd %s1332, %s1346
          %p1348 = scmp.ne.s32.totalorder 0, %s1344
          %s1349 = smul.addr %s1339, 2
          %s1350 = smul.addr %s1349, 64
          %s1351 = scalar_lea.hbm %s7, %s1350
          %s1352 = smul.u32 8, %s1342
          %s1353 = sshll.u32 %s1335, 4
          %s1354 = int_to_ptr.vmem [resolvable:$true] %s1353
          %s1355 = sshll.u32 %s1352, 4
          %1359 = dma.vmem_to_hbm [thread:$0]  (%p1348), %s1354, %s1355, %s1351, %s1332, 128, 128, 8
        $region60: #{tpu_custom_call.1} parent=47 // pred_fallthru
          _
      $region48: #{tpu_custom_call.1} parent=5 // pred_fallthru
        _
      %p1360 = scmp.le.s32.totalorder 2, %s20
      // Predicated region
      $region61: #{tpu_custom_call.1} parent=5 // pred_check
        %p1361 = pneg %p1360
      $region62: #{tpu_custom_call.1} parent=5 // pred_check_branch
        %1363 = sbr.rel (%p1361) target = $region64
      $region63: #{tpu_custom_call.1} parent=5 // pred_region
        %s1364 = ssub.s32 %s20, 2
        // Predicated region
        $region65: #{tpu_custom_call.1} parent=63 // pred_check
          %p1365 = pneg %p201
        $region66: #{tpu_custom_call.1} parent=63 // pred_check_branch
          %1367 = sbr.rel (%p1365) target = $region68
        $region67: #{tpu_custom_call.1} parent=63 // pred_region
          %s1368 = sand.u32 %s186, 1
          %s1369 = scalar_lea.sflag [#allocation4], %s1368
          %s1370 = sand.u32 %s186, 1
          %s1371 = smul.addr %s1370, 128
          %s1372 = scalar_lea.vmem [#allocation7], %s1371
          %1373 = dma.done %s1369, 2048
        $region68: #{tpu_custom_call.1} parent=63 // pred_fallthru
          _
      $region64: #{tpu_custom_call.1} parent=5 // pred_fallthru
        _
    $region6: #{tpu_custom_call.1} parent=1 // loop_footer
      %s24 = sadd.s32 1, %s20
    $region7: #{tpu_custom_call.1} parent=1 // loop_footer_branch
      %19 = sbr.rel target = $region3
    $region8: #{tpu_custom_call.1} parent=1 // loop_exit
      _
    %1374 = vsyncpa [#allocation3], 1
    %s1375 = scalar_lea.sflag [#allocation3], 1
    %1376 = vsyncpa %s1375, 1
    %1377 = vsyncpa [#allocation6], 1
    %1378 = vsyncpa [#allocation4], 1
    %s1379 = scalar_lea.sflag [#allocation4], 1
    %1380 = vsyncpa %s1379, 1

// kernel: tpu_custom_call.1
$region0: #{tpu_custom_call.1}
  #allocation0 [shape = 'u32[]', space=smem, size = 0x4, offset = 0x4, fixed_abs, tag = 'smem constant byte address 0x4 - core index']
  #allocation1 [shape = 'u32[144,128]{1,0:T(1,128)}', space=vmem, size = 0x12000, scoped, tag = 'internal scratch']
  %s0 = inlined_call_operand.hbm [shape: f32[200,256], index: 0, kind: input, shape index: {}]
  %s1 = inlined_call_operand.hbm [shape: bf16[256,128], index: 1, kind: input, shape index: {}]
  %s2 = inlined_call_operand.vmem [shape: f32[1,128], index: 2, kind: input, shape index: {}]
  %s3 = inlined_call_operand.vmem [shape: bf16[128,64], index: 3, kind: input, shape index: {}]
  %s4 = inlined_call_operand.vmem [shape: f32[1,64], index: 4, kind: input, shape index: {}]
  %s5 = inlined_call_operand.vmem [shape: bf16[64,256], index: 5, kind: input, shape index: {}]
  %s6 = inlined_call_operand.vmem [shape: f32[1,256], index: 6, kind: input, shape index: {}]
  %s7 = inlined_call_operand.hbm [shape: bf16[200,256], index: 7, kind: output, shape index: {}]
  %s8 = sld [smem:[#allocation0]]
  $region69: #{tpu_custom_call.1} parent=0
    _
  %s10 = ssub.s32 1, %s8
  %s11 = scalar_select 0, %s10, %s8
  $region1: #{tpu_custom_call.1} parent=0
    #allocation2 [shape = 'u8[262144]{0}', space=vmem, size = 0x40000, scoped, tag = 'input window, operand 0']
    #allocation3 [shape = 's32[2]{0}', space=sflag, size = 0x8, scoped, tag = 'scoped memory for tpu_custom_call.1']
    #allocation4 [shape = 's32[2]{0}', space=sflag, size = 0x8, scoped, tag = 'scoped memory for tpu_custom_call.1']
    #allocation5 [shape = 'u8[65536]{0}', space=vmem, size = 0x10000, scoped, tag = 'input window, operand 1, single buffered']
    #allocation6 [shape = 's32[1]{0}', space=sflag, size = 0x4, scoped, tag = 'scoped memory for tpu_custom_call.1']
    #allocation7 [shape = 'u8[131072]{0}', space=vmem, size = 0x20000, scoped, tag = 'output window, operand 0']
    %12 = vsyncpa [#allocation3], 0
    %s13 = scalar_lea.sflag [#allocation3], 1
    %14 = vsyncpa %s13, 0
    %15 = vsyncpa [#allocation6], 0
    %16 = vsyncpa [#allocation4], 0
    %s17 = scalar_lea.sflag [#allocation4], 1
    %18 = vsyncpa %s17, 0
    loop: start=0, step=1, limit=4
    $region2: #{tpu_custom_call.1} parent=1 // loop_pre_header
      _
    $region3: #{tpu_custom_call.1} parent=1 // loop_header
      %s20 = sphi 0, %s24
      %p21 = scmp.ge.s32.totalorder %s20, 4
      %s30 = sphi 0, %s32
      %s33 = sphi 0, %s30
      %s34 = sphi 0, %s33
      %s50 = sphi 0, %s34
      %s54 = sphi 0, %s54
      %s56 = sphi 0, %s54
      %s57 = sphi 0, %s56
      %s71 = sphi 0, %s57
      %s75 = sphi 0, %s75
      %s77 = sphi 0, %s75
      %s78 = sphi 0, %s77
      %s92 = sphi 0, %s78
      %s96 = sphi 0, %s96
      %s98 = sphi 0, %s96
      %s99 = sphi 0, %s98
      %s113 = sphi 0, %s99
      %s117 = sphi 0, %s117
      %s119 = sphi 0, %s117
      %s120 = sphi 0, %s119
      %s134 = sphi 0, %s120
      %s138 = sphi 0, %s138
      %s140 = sphi 0, %s138
      %s141 = sphi 0, %s140
      %s155 = sphi 0, %s141
      %s159 = sphi 0, %s159
      %s161 = sphi 0, %s159
      %s162 = sphi 0, %s161
      %s176 = sphi 0, %s162
      %s182 = sphi 0, %s184
      %s185 = sphi 0, %s182
      %s186 = sphi 0, %s185
      %s202 = sphi 0, %s186
    $region4: #{tpu_custom_call.1} parent=1 // loop_header_branch
      %23 = sbr.rel (%p21) target = $region8
    $region5: #{tpu_custom_call.1} parent=1 // loop_body
      %s25 = ssub.s32 %s20, 1
      %s26 = ssub.s32 %s20, 2
      %s27 = sadd.s32 %s20, 1
      %s28 = ssub.s32 %s20, %s27
      %p29 = scmp.eq.s32.totalorder %s28, 0
      %s31 = sadd.s32 %s30, 1
      %s32 = scalar_select %p29, %s30, %s31
      %p35 = pneg %p29
      %p36 = scmp.eq.s32.totalorder %s20, 1
      %p37 = por %p35, %p36
      %p38 = scmp.ne.s32.totalorder %s30, %s33
      %p39 = scmp.eq.s32.totalorder %s20, 0
      %p40 = por %p38, %p39
      %p41 = scmp.ne.s32.totalorder %s30, %s33
      %p42 = scmp.eq.s32.totalorder %s25, 1
      %p43 = por %p41, %p42
      %p44 = scmp.ne.s32.totalorder %s33, %s34
      %p45 = scmp.eq.s32.totalorder %s25, 0
      %p46 = por %p44, %p45
      %p47 = scmp.ne.s32.totalorder %s33, %s34
      %p48 = scmp.eq.s32.totalorder %s26, 1
      %p49 = por %p47, %p48
      %p51 = scmp.ne.s32.totalorder %s34, %s50
      %p52 = scmp.eq.s32.totalorder %s26, 0
      %p53 = por %p51, %p52
      %s55 = sadd.s32 %s54, 1
      %p58 = scmp.eq.s32.totalorder %s20, 1
      %p59 = scmp.ne.s32.totalorder %s54, %s56
      %p60 = scmp.eq.s32.totalorder %s20, 0
      %p61 = por %p59, %p60
      %p62 = scmp.ne.s32.totalorder %s54, %s56
      %p63 = scmp.eq.s32.totalorder %s25, 1
      %p64 = por %p62, %p63
      %p65 = scmp.ne.s32.totalorder %s56, %s57
      %p66 = scmp.eq.s32.totalorder %s25, 0
      %p67 = por %p65, %p66
      %p68 = scmp.ne.s32.totalorder %s56, %s57
      %p69 = scmp.eq.s32.totalorder %s26, 1
      %p70 = por %p68, %p69
      %p72 = scmp.ne.s32.totalorder %s57, %s71
      %p73 = scmp.eq.s32.totalorder %s26, 0
      %p74 = por %p72, %p73
      %s76 = sadd.s32 %s75, 1
      %p79 = scmp.eq.s32.totalorder %s20, 1
      %p80 = scmp.ne.s32.totalorder %s75, %s77
      %p81 = scmp.eq.s32.totalorder %s20, 0
      %p82 = por %p80, %p81
      %p83 = scmp.ne.s32.totalorder %s75, %s77
      %p84 = scmp.eq.s32.totalorder %s25, 1
      %p85 = por %p83, %p84
      %p86 = scmp.ne.s32.totalorder %s77, %s78
      %p87 = scmp.eq.s32.totalorder %s25, 0
      %p88 = por %p86, %p87
      %p89 = scmp.ne.s32.totalorder %s77, %s78
      %p90 = scmp.eq.s32.totalorder %s26, 1
      %p91 = por %p89, %p90
      %p93 = scmp.ne.s32.totalorder %s78, %s92
      %p94 = scmp.eq.s32.totalorder %s26, 0
      %p95 = por %p93, %p94
      %s97 = sadd.s32 %s96, 1
      %p100 = scmp.eq.s32.totalorder %s20, 1
      %p101 = scmp.ne.s32.totalorder %s96, %s98
      %p102 = scmp.eq.s32.totalorder %s20, 0
      %p103 = por %p101, %p102
      %p104 = scmp.ne.s32.totalorder %s96, %s98
      %p105 = scmp.eq.s32.totalorder %s25, 1
      %p106 = por %p104, %p105
      %p107 = scmp.ne.s32.totalorder %s98, %s99
      %p108 = scmp.eq.s32.totalorder %s25, 0
      %p109 = por %p107, %p108
      %p110 = scmp.ne.s32.totalorder %s98, %s99
      %p111 = scmp.eq.s32.totalorder %s26, 1
      %p112 = por %p110, %p111
      %p114 = scmp.ne.s32.totalorder %s99, %s113
      %p115 = scmp.eq.s32.totalorder %s26, 0
      %p116 = por %p114, %p115
      %s118 = sadd.s32 %s117, 1
      %p121 = scmp.eq.s32.totalorder %s20, 1
      %p122 = scmp.ne.s32.totalorder %s117, %s119
      %p123 = scmp.eq.s32.totalorder %s20, 0
      %p124 = por %p122, %p123
      %p125 = scmp.ne.s32.totalorder %s117, %s119
      %p126 = scmp.eq.s32.totalorder %s25, 1
      %p127 = por %p125, %p126
      %p128 = scmp.ne.s32.totalorder %s119, %s120
      %p129 = scmp.eq.s32.totalorder %s25, 0
      %p130 = por %p128, %p129
      %p131 = scmp.ne.s32.totalorder %s119, %s120
      %p132 = scmp.eq.s32.totalorder %s26, 1
      %p133 = por %p131, %p132
      %p135 = scmp.ne.s32.totalorder %s120, %s134
      %p136 = scmp.eq.s32.totalorder %s26, 0
      %p137 = por %p135, %p136
      %s139 = sadd.s32 %s138, 1
      %p142 = scmp.eq.s32.totalorder %s20, 1
      %p143 = scmp.ne.s32.totalorder %s138, %s140
      %p144 = scmp.eq.s32.totalorder %s20, 0
      %p145 = por %p143, %p144
      %p146 = scmp.ne.s32.totalorder %s138, %s140
      %p147 = scmp.eq.s32.totalorder %s25, 1
      %p148 = por %p146, %p147
      %p149 = scmp.ne.s32.totalorder %s140, %s141
      %p150 = scmp.eq.s32.totalorder %s25, 0
      %p151 = por %p149, %p150
      %p152 = scmp.ne.s32.totalorder %s140, %s141
      %p153 = scmp.eq.s32.totalorder %s26, 1
      %p154 = por %p152, %p153
      %p156 = scmp.ne.s32.totalorder %s141, %s155
      %p157 = scmp.eq.s32.totalorder %s26, 0
      %p158 = por %p156, %p157
      %s160 = sadd.s32 %s159, 1
      %p163 = scmp.eq.s32.totalorder %s20, 1
      %p164 = scmp.ne.s32.totalorder %s159, %s161
      %p165 = scmp.eq.s32.totalorder %s20, 0
      %p166 = por %p164, %p165
      %p167 = scmp.ne.s32.totalorder %s159, %s161
      %p168 = scmp.eq.s32.totalorder %s25, 1
      %p169 = por %p167, %p168
      %p170 = scmp.ne.s32.totalorder %s161, %s162
      %p171 = scmp.eq.s32.totalorder %s25, 0
      %p172 = por %p170, %p171
      %p173 = scmp.ne.s32.totalorder %s161, %s162
      %p174 = scmp.eq.s32.totalorder %s26, 1
      %p175 = por %p173, %p174
      %p177 = scmp.ne.s32.totalorder %s162, %s176
      %p178 = scmp.eq.s32.totalorder %s26, 0
      %p179 = por %p177, %p178
      %s180 = ssub.s32 %s20, %s27
      %p181 = scmp.eq.s32.totalorder %s180, 0
      %s183 = sadd.s32 %s182, 1
      %s184 = scalar_select %p181, %s182, %s183
      %p187 = pneg %p181
      %p188 = scmp.eq.s32.totalorder %s20, 1
      %p189 = por %p187, %p188
      %p190 = scmp.ne.s32.totalorder %s182, %s185
      %p191 = scmp.eq.s32.totalorder %s20, 0
      %p192 = por %p190, %p191
      %p193 = scmp.ne.s32.totalorder %s182, %s185
      %p194 = scmp.eq.s32.totalorder %s25, 1
      %p195 = por %p193, %p194
      %p196 = scmp.ne.s32.totalorder %s185, %s186
      %p197 = scmp.eq.s32.totalorder %s25, 0
      %p198 = por %p196, %p197
      %p199 = scmp.ne.s32.totalorder %s185, %s186
      %p200 = scmp.eq.s32.totalorder %s26, 1
      %p201 = por %p199, %p200
      %p203 = scmp.ne.s32.totalorder %s186, %s202
      %p204 = scmp.eq.s32.totalorder %s26, 0
      %p205 = por %p203, %p204
      %p206 = scmp.le.s32.totalorder 1, %s20
      %p207 = scmp.lt.s32.totalorder %s20, 3
      %p208 = pnand %p206, %p207
      %p209 = pneg %p208
      // Predicated region
      $region9: #{tpu_custom_call.1} parent=5 // pred_check
        _
      $region10: #{tpu_custom_call.1} parent=5 // pred_check_branch
        %211 = sbr.rel (%p208) target = $region12
      $region11: #{tpu_custom_call.1} parent=5 // pred_region
        %s212 = ssub.s32 %s20, 1
        // Predicated region
        $region13: #{tpu_custom_call.1} parent=11 // pred_check
          %p213 = pneg %p67
        $region14: #{tpu_custom_call.1} parent=11 // pred_check_branch
          %215 = sbr.rel (%p213) target = $region16
        $region15: #{tpu_custom_call.1} parent=11 // pred_region
          %s217 = ssub.s32 2048, 2048
          %218 = vsyncadd [#allocation6], %s217
          %s219 = sshll.u32 [#allocation5], 4
          %s220 = int_to_ptr.vmem [resolvable:$true] %s219
          %225 = dma.hbm_to_vmem [thread:$0]  %s1, 2048, %s220, [#allocation6], 64, 64, 4
        $region16: #{tpu_custom_call.1} parent=11 // pred_fallthru
          _
        // Predicated region
        $region17: #{tpu_custom_call.1} parent=11 // pred_check
          %p226 = pneg %p88
        $region18: #{tpu_custom_call.1} parent=11 // pred_check_branch
          %228 = sbr.rel (%p226) target = $region20
        $region19: #{tpu_custom_call.1} parent=11 // pred_region
          _
        $region20: #{tpu_custom_call.1} parent=11 // pred_fallthru
          _
        // Predicated region
        $region21: #{tpu_custom_call.1} parent=11 // pred_check
          %p229 = pneg %p109
        $region22: #{tpu_custom_call.1} parent=11 // pred_check_branch
          %231 = sbr.rel (%p229) target = $region24
        $region23: #{tpu_custom_call.1} parent=11 // pred_region
          _
        $region24: #{tpu_custom_call.1} parent=11 // pred_fallthru
          _
        // Predicated region
        $region25: #{tpu_custom_call.1} parent=11 // pred_check
          %p232 = pneg %p130
        $region26: #{tpu_custom_call.1} parent=11 // pred_check_branch
          %234 = sbr.rel (%p232) target = $region28
        $region27: #{tpu_custom_call.1} parent=11 // pred_region
          _
        $region28: #{tpu_custom_call.1} parent=11 // pred_fallthru
          _
        // Predicated region
        $region29: #{tpu_custom_call.1} parent=11 // pred_check
          %p235 = pneg %p151
        $region30: #{tpu_custom_call.1} parent=11 // pred_check_branch
          %237 = sbr.rel (%p235) target = $region32
        $region31: #{tpu_custom_call.1} parent=11 // pred_region
          _
        $region32: #{tpu_custom_call.1} parent=11 // pred_fallthru
          _
        // Predicated region
        $region33: #{tpu_custom_call.1} parent=11 // pred_check
          %p238 = pneg %p172
        $region34: #{tpu_custom_call.1} parent=11 // pred_check_branch
          %240 = sbr.rel (%p238) target = $region36
        $region35: #{tpu_custom_call.1} parent=11 // pred_region
          _
        $region36: #{tpu_custom_call.1} parent=11 // pred_fallthru
          _
      $region12: #{tpu_custom_call.1} parent=5 // pred_fallthru
        _
      %p241 = scmp.lt.s32.totalorder %s20, 2
      // Predicated region
      $region37: #{tpu_custom_call.1} parent=5 // pred_check
        %p242 = pneg %p241
      $region38: #{tpu_custom_call.1} parent=5 // pred_check_branch
        %244 = sbr.rel (%p242) target = $region40
      $region39: #{tpu_custom_call.1} parent=5 // pred_region
        // Predicated region
        $region41: #{tpu_custom_call.1} parent=39 // pred_check
          %p245 = pneg %p40
        $region42: #{tpu_custom_call.1} parent=39 // pred_check_branch
          %247 = sbr.rel (%p245) target = $region44
        $region43: #{tpu_custom_call.1} parent=39 // pred_region
          %s248 = sand.u32 %s30, 1
          %s249 = scalar_lea.sflag [#allocation3], %s248
          %s250 = sand.u32 %s30, 1
          %s251 = smul.addr %s250, 256
          %s252 = scalar_lea.vmem [#allocation2], %s251
          %s253 = smul.u32 16, %s20
          %s254 = ssub.s32 25, %s253
          %p255 = scmp.lt.s32.totalorder %s254, 16
          %s256 = scalar_select %p255, %s254, 16
          %s257 = smul.u32 128, %s256
          %s258 = smul.u32 %s257, 2
          %s260 = ssub.s32 4096, %s258
          %261 = vsyncadd %s249, %s260
          %p262 = scmp.ne.s32.totalorder 0, %s258
          %s263 = smul.addr %s253, 2
          %s264 = smul.addr %s263, 128
          %s265 = scalar_lea.hbm %s0, %s264
          %s266 = smul.u32 16, %s256
          %s267 = sshll.u32 %s252, 4
          %s268 = int_to_ptr.vmem [resolvable:$true] %s267
          %s269 = sshll.u32 %s266, 4
          %273 = dma.hbm_to_vmem [thread:$0]  (%p262), %s265, %s269, %s268, %s249, 256, 256, 16
        $region44: #{tpu_custom_call.1} parent=39 // pred_fallthru
          _
      $region40: #{tpu_custom_call.1} parent=5 // pred_fallthru
        _
      %p274 = scmp.le.s32.totalorder 1, %s20
      %p275 = scmp.lt.s32.totalorder %s20, 3
      %p276 = pnand %p274, %p275
      %p277 = pneg %p276
      // Predicated region
      $region45: #{tpu_custom_call.1} parent=5 // pred_check
        _
      $region46: #{tpu_custom_call.1} parent=5 // pred_check_branch
        %279 = sbr.rel (%p276) target = $region48
      $region47: #{tpu_custom_call.1} parent=5 // pred_region
        %s280 = ssub.s32 %s20, 1
        %s281 = sand.u32 %s33, 1
        %s282 = scalar_lea.sflag [#allocation3], %s281
        %s283 = sand.u32 %s33, 1
        %s284 = smul.addr %s283, 256
        %s285 = scalar_lea.vmem [#allocation2], %s284
        // Predicated region
        $region49: #{tpu_custom_call.1} parent=47 // pred_check
          %p286 = pneg %p46
        $region50: #{tpu_custom_call.1} parent=47 // pred_check_branch
          %288 = sbr.rel (%p286) target = $region52
        $region51: #{tpu_custom_call.1} parent=47 // pred_region
          %289 = dma.done %s282, 4096
        $region52: #{tpu_custom_call.1} parent=47 // pred_fallthru
          _
        // Predicated region
        $region53: #{tpu_custom_call.1} parent=47 // pred_check
          %p290 = pneg %p67
        $region54: #{tpu_custom_call.1} parent=47 // pred_check_branch
          %292 = sbr.rel (%p290) target = $region56
        $region55: #{tpu_custom_call.1} parent=47 // pred_region
          %293 = dma.done [#allocation6], 2048
        $region56: #{tpu_custom_call.1} parent=47 // pred_fallthru
          _
        %s294 = sand.u32 %s33, 1
        %s295 = scalar_lea.sflag [#allocation3], %s294
        %s296 = sand.u32 %s33, 1
        %s297 = smul.addr %s296, 256
        %s298 = scalar_lea.vmem [#allocation2], %s297
        %p299 = pneg %p46
        %p300 = pneg %p43
        %p301 = pneg %p67
        %p302 = pneg %p64
        %p303 = pneg %p88
        %p304 = pneg %p85
        %p305 = pneg %p109
        %p306 = pneg %p106
        %p307 = pneg %p130
        %p308 = pneg %p127
        %p309 = pneg %p151
        %p310 = pneg %p148
        %p311 = pneg %p172
        %p312 = pneg %p169
        %p313 = pneg %p198
        %p314 = pneg %p195
        %s315 = sand.u32 %s185, 1
        %s316 = scalar_lea.sflag [#allocation4], %s315
        %s317 = sand.u32 %s185, 1
        %s318 = smul.addr %s317, 128
        %s319 = scalar_lea.vmem [#allocation7], %s318
        %s320 = smul.u32 16, %s25
        %s321 = ssub.s32 25, %s320
        %p322 = scmp.lt.s32.totalorder %s321, 16
        %s323 = scalar_select %p322, %s321, 16
        %s324 = smul.u32 128, %s323
        %s325 = smul.u32 %s324, 2
        %s326 = smul.u32 16, %s25
        %s327 = ssub.s32 25, %s326
        %p328 = scmp.lt.s32.totalorder %s327, 16
        %s329 = scalar_select %p328, %s327, 16
        %s330 = smul.u32 64, %s329
        %s331 = smul.u32 %s330, 2
        %v333 = vld [vmem:[%s285] sm:$0xff]
        %v334 = vld [vmem:[%s285 + $0x8] sm:$0xff]
        %v335 = vld [vmem:[%s285 + $0x10] sm:$0xff]
        %v336 = vld [vmem:[%s285 + $0x18] sm:$0xff]
        %v337 = vld [vmem:[%s285 + $0x20] sm:$0xff]
        %v338 = vld [vmem:[%s285 + $0x28] sm:$0xff]
        %v339 = vld [vmem:[%s285 + $0x30] sm:$0xff]
        %v340 = vld [vmem:[%s285 + $0x38] sm:$0xff]
        %v341 = vld [vmem:[%s285 + $0x40] sm:$0xff]
        %v342 = vld [vmem:[%s285 + $0x48] sm:$0xff]
        %v343 = vld [vmem:[%s285 + $0x50] sm:$0xff]
        %v344 = vld [vmem:[%s285 + $0x58] sm:$0xff]
        %v345 = vld [vmem:[%s285 + $0x60] sm:$0xff]
        %v346 = vld [vmem:[%s285 + $0x68] sm:$0xff]
        %v347 = vld [vmem:[%s285 + $0x70] sm:$0xff]
        %v348 = vld [vmem:[%s285 + $0x78] sm:$0xff]
        %v349 = vld [vmem:[%s285 + $0x80] sm:$0xff]
        %v350 = vld [vmem:[%s285 + $0x88] sm:$0xff]
        %v351 = vld [vmem:[%s285 + $0x90] sm:$0xff]
        %v352 = vld [vmem:[%s285 + $0x98] sm:$0xff]
        %v353 = vld [vmem:[%s285 + $0xa0] sm:$0xff]
        %v354 = vld [vmem:[%s285 + $0xa8] sm:$0xff]
        %v355 = vld [vmem:[%s285 + $0xb0] sm:$0xff]
        %v356 = vld [vmem:[%s285 + $0xb8] sm:$0xff]
        %v357 = vld [vmem:[%s285 + $0xc0] sm:$0xff]
        %v358 = vld [vmem:[%s285 + $0xc8] sm:$0xff]
        %v359 = vld [vmem:[%s285 + $0xd0] sm:$0xff]
        %v360 = vld [vmem:[%s285 + $0xd8] sm:$0xff]
        %v361 = vld [vmem:[%s285 + $0xe0] sm:$0xff]
        %v362 = vld [vmem:[%s285 + $0xe8] sm:$0xff]
        %v363 = vld [vmem:[%s285 + $0xf0] sm:$0xff]
        %v364 = vld [vmem:[%s285 + $0xf8] sm:$0xff]
        %v365 = vpack.c.bf16 %v335, %v333
        %v366 = vpack.c.bf16 %v336, %v334
        %v367 = vpack.c.bf16 %v339, %v337
        %v368 = vpack.c.bf16 %v340, %v338
        %v369 = vpack.c.bf16 %v343, %v341
        %v370 = vpack.c.bf16 %v344, %v342
        %v371 = vpack.c.bf16 %v347, %v345
        %v372 = vpack.c.bf16 %v348, %v346
        %v373 = vpack.c.bf16 %v351, %v349
        %v374 = vpack.c.bf16 %v352, %v350
        %v375 = vpack.c.bf16 %v355, %v353
        %v376 = vpack.c.bf16 %v356, %v354
        %v377 = vpack.c.bf16 %v359, %v357
        %v378 = vpack.c.bf16 %v360, %v358
        %v379 = vpack.c.bf16 %v363, %v361
        %v380 = vpack.c.bf16 %v364, %v362
        %v381 = vld [vmem:[#allocation5] sm:$0xf]
        %v382 = vld [vmem:[#allocation5 + $0x4] sm:$0xf]
        %v383 = vld [vmem:[#allocation5 + $0x8] sm:$0xf]
        %v384 = vld [vmem:[#allocation5 + $0xc] sm:$0xf]
        %v385 = vld [vmem:[#allocation5 + $0x10] sm:$0xf]
        %v386 = vld [vmem:[#allocation5 + $0x14] sm:$0xf]
        %v387 = vld [vmem:[#allocation5 + $0x18] sm:$0xf]
        %v388 = vld [vmem:[#allocation5 + $0x1c] sm:$0xf]
        %v389 = vld [vmem:[#allocation5 + $0x20] sm:$0xf]
        %v390 = vld [vmem:[#allocation5 + $0x24] sm:$0xf]
        %v391 = vld [vmem:[#allocation5 + $0x28] sm:$0xf]
        %v392 = vld [vmem:[#allocation5 + $0x2c] sm:$0xf]
        %v393 = vld [vmem:[#allocation5 + $0x30] sm:$0xf]
        %v394 = vld [vmem:[#allocation5 + $0x34] sm:$0xf]
        %v395 = vld [vmem:[#allocation5 + $0x38] sm:$0xf]
        %v396 = vld [vmem:[#allocation5 + $0x3c] sm:$0xf]
        %v397 = vld [vmem:[#allocation5 + $0x40] sm:$0xf]
        %v398 = vld [vmem:[#allocation5 + $0x44] sm:$0xf]
        %v399 = vld [vmem:[#allocation5 + $0x48] sm:$0xf]
        %v400 = vld [vmem:[#allocation5 + $0x4c] sm:$0xf]
        %v401 = vld [vmem:[#allocation5 + $0x50] sm:$0xf]
        %v402 = vld [vmem:[#allocation5 + $0x54] sm:$0xf]
        %v403 = vld [vmem:[#allocation5 + $0x58] sm:$0xf]
        %v404 = vld [vmem:[#allocation5 + $0x5c] sm:$0xf]
        %v405 = vld [vmem:[#allocation5 + $0x60] sm:$0xf]
        %v406 = vld [vmem:[#allocation5 + $0x64] sm:$0xf]
        %v407 = vld [vmem:[#allocation5 + $0x68] sm:$0xf]
        %v408 = vld [vmem:[#allocation5 + $0x6c] sm:$0xf]
        %v409 = vld [vmem:[#allocation5 + $0x70] sm:$0xf]
        %v410 = vld [vmem:[#allocation5 + $0x74] sm:$0xf]
        %v411 = vld [vmem:[#allocation5 + $0x78] sm:$0xf]
        %v412 = vld [vmem:[#allocation5 + $0x7c] sm:$0xf]
        %v413 = vld [vmem:[%s2] sm:$0x1]
        %v415 = vlaneseq
        %v416 = vshrl.u32 %v415, 7
        %v417 = vsub.s32 0, %v416
        %v418 = vrot.slane %v413, %v417
        %v452 = vunpack.c.l.b16 %v381
        %v453 = vunpack.c.l.b16 %v382
        %v454 = vunpack.c.l.b16 %v383
        %v455 = vunpack.c.l.b16 %v384
        %v456 = vunpack.c.l.b16 %v385
        %v457 = vunpack.c.l.b16 %v386
        %v458 = vunpack.c.l.b16 %v387
        %v459 = vunpack.c.l.b16 %v388
        %v460 = vunpack.c.l.b16 %v389
        %v461 = vunpack.c.l.b16 %v390
        %v462 = vunpack.c.l.b16 %v391
        %v463 = vunpack.c.l.b16 %v392
        %v464 = vunpack.c.l.b16 %v393
        %v465 = vunpack.c.l.b16 %v394
        %v466 = vunpack.c.l.b16 %v395
        %v467 = vunpack.c.l.b16 %v396
        %v468 = vunpack.c.l.b16 %v397
        %v469 = vunpack.c.l.b16 %v398
        %v470 = vunpack.c.l.b16 %v399
        %v471 = vunpack.c.l.b16 %v400
        %v472 = vunpack.c.l.b16 %v401
        %v473 = vunpack.c.l.b16 %v402
        %v474 = vunpack.c.l.b16 %v403
        %v475 = vunpack.c.l.b16 %v404
        %v476 = vunpack.c.l.b16 %v405
        %v477 = vunpack.c.l.b16 %v406
        %v478 = vunpack.c.l.b16 %v407
        %v479 = vunpack.c.l.b16 %v408
        %v480 = vunpack.c.l.b16 %v409
        %v481 = vunpack.c.l.b16 %v410
        %v482 = vunpack.c.l.b16 %v411
        %v483 = vunpack.c.l.b16 %v412
        %v484 = vpack.c.b16 %v453, %v452
        %v485 = vpack.c.b16 %v455, %v454
        %v486 = vpack.c.b16 %v457, %v456
        %v487 = vpack.c.b16 %v459, %v458
        %v488 = vpack.c.b16 %v461, %v460
        %v489 = vpack.c.b16 %v463, %v462
        %v490 = vpack.c.b16 %v465, %v464
        %v491 = vpack.c.b16 %v467, %v466
        %v492 = vpack.c.b16 %v469, %v468
        %v493 = vpack.c.b16 %v471, %v470
        %v494 = vpack.c.b16 %v473, %v472
        %v495 = vpack.c.b16 %v475, %v474
        %v496 = vpack.c.b16 %v477, %v476
        %v497 = vpack.c.b16 %v479, %v478
        %v498 = vpack.c.b16 %v481, %v480
        %v499 = vpack.c.b16 %v483, %v482
        %516 = vmatprep.subr.bf16.mxu0 0
        %517 = vmatpush1.bf16.msra.mxu0 %v491
        %518 = vmatprep.subr.bf16.mxu0 0
        %519 = vmatpush1.bf16.msra.mxu0 %v490
        %520 = vmatprep.subr.bf16.mxu0 0
        %521 = vmatpush1.bf16.msra.mxu0 %v489
        %522 = vmatprep.subr.bf16.mxu0 0
        %523 = vmatpush1.bf16.msra.mxu0 %v488
        %524 = vmatprep.subr.bf16.mxu0 0
        %525 = vmatpush1.bf16.msra.mxu0 %v487
        %526 = vmatprep.subr.bf16.mxu0 0
        %527 = vmatpush1.bf16.msra.mxu0 %v486
        %528 = vmatprep.subr.bf16.mxu0 0
        %529 = vmatpush1.bf16.msra.mxu0 %v485
        %530 = vmatprep.subr.bf16.mxu0 0
        %531 = vmatpush1.bf16.msra.mxu0 %v484
        %532 = vmatprep.subr.bf16.mxu0 0
        %533 = vmatpush2.bf16.msra.mxu0 %v499
        %534 = vmatprep.subr.bf16.mxu0 0
        %535 = vmatpush2.bf16.msra.mxu0 %v498
        %536 = vmatprep.subr.bf16.mxu0 0
        %537 = vmatpush2.bf16.msra.mxu0 %v497
        %538 = vmatprep.subr.bf16.mxu0 0
        %539 = vmatpush2.bf16.msra.mxu0 %v496
        %540 = vmatprep.subr.bf16.mxu0 0
        %541 = vmatpush2.bf16.msra.mxu0 %v495
        %542 = vmatprep.subr.bf16.mxu0 0
        %543 = vmatpush2.bf16.msra.mxu0 %v494
        %544 = vmatprep.subr.bf16.mxu0 0
        %545 = vmatpush2.bf16.msra.mxu0 %v493
        %546 = vmatprep.subr.bf16.mxu0 0
        %547 = vmatpush2.bf16.msra.mxu0 %v492
        %548 = vmatprep.mubr.bf16.mxu0 %v366
        %549 = vmatmul.mubr.bf16.gmra.mxu0 %v365
        %v550 = vpop.f32.mrf.mxu0
        %v551 = vadd.f32 %v418, %v550
        %v552 = vpop.f32.mrf.mxu0
        %v553 = vpop.f32.mrf.mxu0
        %v554 = vadd.f32 %v418, %v553
        %v555 = vpop.f32.mrf.mxu0
        %556 = vmatprep.mubr.bf16.mxu0 %v368
        %557 = vmatmul.mubr.bf16.gmra.mxu0 %v367
        %v558 = vpop.f32.mrf.mxu0
        %v559 = vadd.f32 %v418, %v558
        %v560 = vpop.f32.mrf.mxu0
        %v561 = vpop.f32.mrf.mxu0
        %v562 = vadd.f32 %v418, %v561
        %v563 = vpop.f32.mrf.mxu0
        %564 = vmatprep.mubr.bf16.mxu0 %v370
        %565 = vmatmul.mubr.bf16.gmra.mxu0 %v369
        %v566 = vpop.f32.mrf.mxu0
        %v567 = vadd.f32 %v418, %v566
        %v568 = vpop.f32.mrf.mxu0
        %v569 = vpop.f32.mrf.mxu0
        %v570 = vadd.f32 %v418, %v569
        %v571 = vpop.f32.mrf.mxu0
        %572 = vmatprep.mubr.bf16.mxu0 %v372
        %573 = vmatmul.mubr.bf16.gmra.mxu0 %v371
        %v574 = vpop.f32.mrf.mxu0
        %v575 = vadd.f32 %v418, %v574
        %v576 = vpop.f32.mrf.mxu0
        %v577 = vpop.f32.mrf.mxu0
        %v578 = vadd.f32 %v418, %v577
        %v579 = vpop.f32.mrf.mxu0
        %580 = vmatprep.mubr.bf16.mxu0 %v374
        %581 = vmatmul.mubr.bf16.gmra.mxu0 %v373
        %v582 = vpop.f32.mrf.mxu0
        %v583 = vadd.f32 %v418, %v582
        %v584 = vpop.f32.mrf.mxu0
        %v585 = vpop.f32.mrf.mxu0
        %v586 = vadd.f32 %v418, %v585
        %v587 = vpop.f32.mrf.mxu0
        %588 = vmatprep.mubr.bf16.mxu0 %v376
        %589 = vmatmul.mubr.bf16.gmra.mxu0 %v375
        %v590 = vpop.f32.mrf.mxu0
        %v591 = vadd.f32 %v418, %v590
        %v592 = vpop.f32.mrf.mxu0
        %v593 = vpop.f32.mrf.mxu0
        %v594 = vadd.f32 %v418, %v593
        %v595 = vpop.f32.mrf.mxu0
        %596 = vmatprep.mubr.bf16.mxu0 %v378
        %597 = vmatmul.mubr.bf16.gmra.mxu0 %v377
        %v598 = vpop.f32.mrf.mxu0
        %v599 = vadd.f32 %v418, %v598
        %v600 = vpop.f32.mrf.mxu0
        %v601 = vpop.f32.mrf.mxu0
        %v602 = vadd.f32 %v418, %v601
        %v603 = vpop.f32.mrf.mxu0
        %604 = vmatprep.mubr.bf16.mxu0 %v380
        %605 = vmatmul.mubr.bf16.gmra.mxu0 %v379
        %v606 = vpop.f32.mrf.mxu0
        %v607 = vadd.f32 %v418, %v606
        %v608 = vpop.f32.mrf.mxu0
        %v609 = vpop.f32.mrf.mxu0
        %v610 = vadd.f32 %v418, %v609
        %v611 = vpop.f32.mrf.mxu0
        %612 = vdwg.mxu0
        %v613 = vmax.f32 %v551, 0.0
        %v614 = vmax.f32 %v554, 0.0
        %v615 = vmax.f32 %v559, 0.0
        %v616 = vmax.f32 %v562, 0.0
        %v617 = vmax.f32 %v567, 0.0
        %v618 = vmax.f32 %v570, 0.0
        %v619 = vmax.f32 %v575, 0.0
        %v620 = vmax.f32 %v578, 0.0
        %v621 = vmax.f32 %v583, 0.0
        %v622 = vmax.f32 %v586, 0.0
        %v623 = vmax.f32 %v591, 0.0
        %v624 = vmax.f32 %v594, 0.0
        %v625 = vmax.f32 %v599, 0.0
        %v626 = vmax.f32 %v602, 0.0
        %v627 = vmax.f32 %v607, 0.0
        %v628 = vmax.f32 %v610, 0.0
        %v629 = vpack.c.bf16 %v614, %v613
        %v630 = vpack.c.bf16 %v616, %v615
        %v631 = vpack.c.bf16 %v618, %v617
        %v632 = vpack.c.bf16 %v620, %v619
        %v633 = vpack.c.bf16 %v622, %v621
        %v634 = vpack.c.bf16 %v624, %v623
        %v635 = vpack.c.bf16 %v626, %v625
        %v636 = vpack.c.bf16 %v628, %v627
        %v637 = vld [vmem:[%s3] sm:$0xf]
        %v638 = vld [vmem:[%s3 + $0x4] sm:$0xf]
        %v639 = vld [vmem:[%s3 + $0x8] sm:$0xf]
        %v640 = vld [vmem:[%s3 + $0xc] sm:$0xf]
        %v641 = vld [vmem:[%s3 + $0x10] sm:$0xf]
        %v642 = vld [vmem:[%s3 + $0x14] sm:$0xf]
        %v643 = vld [vmem:[%s3 + $0x18] sm:$0xf]
        %v644 = vld [vmem:[%s3 + $0x1c] sm:$0xf]
        %v645 = vld [vmem:[%s3 + $0x20] sm:$0xf]
        %v646 = vld [vmem:[%s3 + $0x24] sm:$0xf]
        %v647 = vld [vmem:[%s3 + $0x28] sm:$0xf]
        %v648 = vld [vmem:[%s3 + $0x2c] sm:$0xf]
        %v649 = vld [vmem:[%s3 + $0x30] sm:$0xf]
        %v650 = vld [vmem:[%s3 + $0x34] sm:$0xf]
        %v651 = vld [vmem:[%s3 + $0x38] sm:$0xf]
        %v652 = vld [vmem:[%s3 + $0x3c] sm:$0xf]
        %v653 = vld [vmem:[%s4] sm:$0x1]
        %v655 = vlaneseq
        %v656 = vshrl.u32 %v655, 7
        %v657 = vsub.s32 0, %v656
        %v658 = vrot.slane %v653, %v657
        %v676 = vunpack.c.l.b16 %v637
        %v677 = vunpack.c.l.b16 %v638
        %v678 = vunpack.c.l.b16 %v639
        %v679 = vunpack.c.l.b16 %v640
        %v680 = vunpack.c.l.b16 %v641
        %v681 = vunpack.c.l.b16 %v642
        %v682 = vunpack.c.l.b16 %v643
        %v683 = vunpack.c.l.b16 %v644
        %v684 = vunpack.c.l.b16 %v645
        %v685 = vunpack.c.l.b16 %v646
        %v686 = vunpack.c.l.b16 %v647
        %v687 = vunpack.c.l.b16 %v648
        %v688 = vunpack.c.l.b16 %v649
        %v689 = vunpack.c.l.b16 %v650
        %v690 = vunpack.c.l.b16 %v651
        %v691 = vunpack.c.l.b16 %v652
        %v692 = vpack.c.b16 %v677, %v676
        %v693 = vpack.c.b16 %v679, %v678
        %v694 = vpack.c.b16 %v681, %v680
        %v695 = vpack.c.b16 %v683, %v682
        %v696 = vpack.c.b16 %v685, %v684
        %v697 = vpack.c.b16 %v687, %v686
        %v698 = vpack.c.b16 %v689, %v688
        %v699 = vpack.c.b16 %v691, %v690
        %708 = vmatprep.subr.bf16.mxu0 0
        %709 = vmatpush1.bf16.msra.mxu0 %v699
        %710 = vmatprep.subr.bf16.mxu0 0
        %711 = vmatpush1.bf16.msra.mxu0 %v698
        %712 = vmatprep.subr.bf16.mxu0 0
        %713 = vmatpush1.bf16.msra.mxu0 %v697
        %714 = vmatprep.subr.bf16.mxu0 0
        %715 = vmatpush1.bf16.msra.mxu0 %v696
        %716 = vmatprep.subr.bf16.mxu0 0
        %717 = vmatpush1.bf16.msra.mxu0 %v695
        %718 = vmatprep.subr.bf16.mxu0 0
        %719 = vmatpush1.bf16.msra.mxu0 %v694
        %720 = vmatprep.subr.bf16.mxu0 0
        %721 = vmatpush1.bf16.msra.mxu0 %v693
        %722 = vmatprep.subr.bf16.mxu0 0
        %723 = vmatpush1.bf16.msra.mxu0 %v692
        %724 = vmatprep.subr.bf16.mxu0 0
        %725 = vmatpush2.bf16.msra.mxu0 0
        %726 = vmatprep.subr.bf16.mxu0 0
        %727 = vmatpush2.bf16.msra.mxu0 0
        %728 = vmatprep.subr.bf16.mxu0 0
        %729 = vmatpush2.bf16.msra.mxu0 0
        %730 = vmatprep.subr.bf16.mxu0 0
        %731 = vmatpush2.bf16.msra.mxu0 0
        %732 = vmatprep.subr.bf16.mxu0 0
        %733 = vmatpush2.bf16.msra.mxu0 0
        %734 = vmatprep.subr.bf16.mxu0 0
        %735 = vmatpush2.bf16.msra.mxu0 0
        %736 = vmatprep.subr.bf16.mxu0 0
        %737 = vmatpush2.bf16.msra.mxu0 0
        %738 = vmatprep.subr.bf16.mxu0 0
        %739 = vmatpush2.bf16.msra.mxu0 0
        %740 = vmatprep.mubr.bf16.mxu0 0
        %741 = vmatmul.mubr.bf16.gmra.mxu0 %v629
        %v742 = vpop.f32.mrf.mxu0
        %v743 = vadd.f32 %v658, %v742
        %v744 = vpop.f32.mrf.mxu0
        %v745 = vpop.f32.mrf.mxu0
        %v746 = vadd.f32 %v658, %v745
        %v747 = vpop.f32.mrf.mxu0
        %748 = vmatprep.mubr.bf16.mxu0 0
        %749 = vmatmul.mubr.bf16.gmra.mxu0 %v630
        %v750 = vpop.f32.mrf.mxu0
        %v751 = vadd.f32 %v658, %v750
        %v752 = vpop.f32.mrf.mxu0
        %v753 = vpop.f32.mrf.mxu0
        %v754 = vadd.f32 %v658, %v753
        %v755 = vpop.f32.mrf.mxu0
        %756 = vmatprep.mubr.bf16.mxu0 0
        %757 = vmatmul.mubr.bf16.gmra.mxu0 %v631
        %v758 = vpop.f32.mrf.mxu0
        %v759 = vadd.f32 %v658, %v758
        %v760 = vpop.f32.mrf.mxu0
        %v761 = vpop.f32.mrf.mxu0
        %v762 = vadd.f32 %v658, %v761
        %v763 = vpop.f32.mrf.mxu0
        %764 = vmatprep.mubr.bf16.mxu0 0
        %765 = vmatmul.mubr.bf16.gmra.mxu0 %v632
        %v766 = vpop.f32.mrf.mxu0
        %v767 = vadd.f32 %v658, %v766
        %v768 = vpop.f32.mrf.mxu0
        %v769 = vpop.f32.mrf.mxu0
        %v770 = vadd.f32 %v658, %v769
        %v771 = vpop.f32.mrf.mxu0
        %772 = vmatprep.mubr.bf16.mxu0 0
        %773 = vmatmul.mubr.bf16.gmra.mxu0 %v633
        %v774 = vpop.f32.mrf.mxu0
        %v775 = vadd.f32 %v658, %v774
        %v776 = vpop.f32.mrf.mxu0
        %v777 = vpop.f32.mrf.mxu0
        %v778 = vadd.f32 %v658, %v777
        %v779 = vpop.f32.mrf.mxu0
        %780 = vmatprep.mubr.bf16.mxu0 0
        %781 = vmatmul.mubr.bf16.gmra.mxu0 %v634
        %v782 = vpop.f32.mrf.mxu0
        %v783 = vadd.f32 %v658, %v782
        %v784 = vpop.f32.mrf.mxu0
        %v785 = vpop.f32.mrf.mxu0
        %v786 = vadd.f32 %v658, %v785
        %v787 = vpop.f32.mrf.mxu0
        %788 = vmatprep.mubr.bf16.mxu0 0
        %789 = vmatmul.mubr.bf16.gmra.mxu0 %v635
        %v790 = vpop.f32.mrf.mxu0
        %v791 = vadd.f32 %v658, %v790
        %v792 = vpop.f32.mrf.mxu0
        %v793 = vpop.f32.mrf.mxu0
        %v794 = vadd.f32 %v658, %v793
        %v795 = vpop.f32.mrf.mxu0
        %796 = vmatprep.mubr.bf16.mxu0 0
        %797 = vmatmul.mubr.bf16.gmra.mxu0 %v636
        %v798 = vpop.f32.mrf.mxu0
        %v799 = vadd.f32 %v658, %v798
        %v800 = vpop.f32.mrf.mxu0
        %v801 = vpop.f32.mrf.mxu0
        %v802 = vadd.f32 %v658, %v801
        %v803 = vpop.f32.mrf.mxu0
        %804 = vdwg.mxu0
        %v805 = vmax.f32 %v743, 0.0
        %v806 = vmax.f32 %v746, 0.0
        %v807 = vmax.f32 %v751, 0.0
        %v808 = vmax.f32 %v754, 0.0
        %v809 = vmax.f32 %v759, 0.0
        %v810 = vmax.f32 %v762, 0.0
        %v811 = vmax.f32 %v767, 0.0
        %v812 = vmax.f32 %v770, 0.0
        %v813 = vmax.f32 %v775, 0.0
        %v814 = vmax.f32 %v778, 0.0
        %v815 = vmax.f32 %v783, 0.0
        %v816 = vmax.f32 %v786, 0.0
        %v817 = vmax.f32 %v791, 0.0
        %v818 = vmax.f32 %v794, 0.0
        %v819 = vmax.f32 %v799, 0.0
        %v820 = vmax.f32 %v802, 0.0
        %v821 = vpack.c.bf16 %v806, %v805
        %v822 = vpack.c.bf16 %v808, %v807
        %v823 = vpack.c.bf16 %v810, %v809
        %v824 = vpack.c.bf16 %v812, %v811
        %v825 = vpack.c.bf16 %v814, %v813
        %v826 = vpack.c.bf16 %v816, %v815
        %v827 = vpack.c.bf16 %v818, %v817
        %v828 = vpack.c.bf16 %v820, %v819
        %v829 = vld [vmem:[%s5] sm:$0xff]
        %v830 = vld [vmem:[%s5 + $0x8] sm:$0xff]
        %v831 = vld [vmem:[%s5 + $0x10] sm:$0xff]
        %v832 = vld [vmem:[%s5 + $0x18] sm:$0xff]
        %v833 = vld [vmem:[%s5 + $0x20] sm:$0xff]
        %v834 = vld [vmem:[%s5 + $0x28] sm:$0xff]
        %v835 = vld [vmem:[%s5 + $0x30] sm:$0xff]
        %v836 = vld [vmem:[%s5 + $0x38] sm:$0xff]
        %v837 = vld [vmem:[%s6] sm:$0x3]
        %v839 = vlaneseq
        %v840 = vshrl.u32 %v839, 7
        %v841 = vsub.s32 0, %v840
        %v842 = vrot.slane %v837, %v841
        %v843 = vlaneseq
        %v844 = vshrl.u32 %v843, 7
        %v845 = vsub.s32 1, %v844
        %v846 = vrot.slane %v837, %v845
        %v857 = vunpack.c.l.b16 %v829
        %v858 = vunpack.c.h.b16 %v829
        %v859 = vunpack.c.l.b16 %v830
        %v860 = vunpack.c.h.b16 %v830
        %v861 = vunpack.c.l.b16 %v831
        %v862 = vunpack.c.h.b16 %v831
        %v863 = vunpack.c.l.b16 %v832
        %v864 = vunpack.c.h.b16 %v832
        %v865 = vunpack.c.l.b16 %v833
        %v866 = vunpack.c.h.b16 %v833
        %v867 = vunpack.c.l.b16 %v834
        %v868 = vunpack.c.h.b16 %v834
        %v869 = vunpack.c.l.b16 %v835
        %v870 = vunpack.c.h.b16 %v835
        %v871 = vunpack.c.l.b16 %v836
        %v872 = vunpack.c.h.b16 %v836
        %v873 = vpack.c.b16 %v859, %v857
        %v874 = vpack.c.b16 %v860, %v858
        %v875 = vpack.c.b16 %v863, %v861
        %v876 = vpack.c.b16 %v864, %v862
        %v877 = vpack.c.b16 %v867, %v865
        %v878 = vpack.c.b16 %v868, %v866
        %v879 = vpack.c.b16 %v871, %v869
        %v880 = vpack.c.b16 %v872, %v870
        %vm889 = vcmask 523264
        %v891 = vsel %vm889, %v821, 0
        %v894 = vsel %vm889, %v822, 0
        %v897 = vsel %vm889, %v823, 0
        %v900 = vsel %vm889, %v824, 0
        %v903 = vsel %vm889, %v825, 0
        %v906 = vsel %vm889, %v826, 0
        %v909 = vsel %vm889, %v827, 0
        %v912 = vsel %vm889, %v828, 0
        %914 = vmatprep.subr.bf16.mxu0 0
        %915 = vmatpush1.bf16.msra.mxu0 0
        %916 = vmatprep.subr.bf16.mxu0 0
        %917 = vmatpush1.bf16.msra.mxu0 0
        %918 = vmatprep.subr.bf16.mxu0 0
        %919 = vmatpush1.bf16.msra.mxu0 0
        %920 = vmatprep.subr.bf16.mxu0 0
        %921 = vmatpush1.bf16.msra.mxu0 0
        %922 = vmatprep.subr.bf16.mxu0 %v880
        %923 = vmatpush1.bf16.msra.mxu0 %v879
        %924 = vmatprep.subr.bf16.mxu0 %v878
        %925 = vmatpush1.bf16.msra.mxu0 %v877
        %926 = vmatprep.subr.bf16.mxu0 %v876
        %927 = vmatpush1.bf16.msra.mxu0 %v875
        %928 = vmatprep.subr.bf16.mxu0 %v874
        %929 = vmatpush1.bf16.msra.mxu0 %v873
        %930 = vmatprep.subr.bf16.mxu0 0
        %931 = vmatpush2.bf16.msra.mxu0 0
        %932 = vmatprep.subr.bf16.mxu0 0
        %933 = vmatpush2.bf16.msra.mxu0 0
        %934 = vmatprep.subr.bf16.mxu0 0
        %935 = vmatpush2.bf16.msra.mxu0 0
        %936 = vmatprep.subr.bf16.mxu0 0
        %937 = vmatpush2.bf16.msra.mxu0 0
        %938 = vmatprep.subr.bf16.mxu0 0
        %939 = vmatpush2.bf16.msra.mxu0 0
        %940 = vmatprep.subr.bf16.mxu0 0
        %941 = vmatpush2.bf16.msra.mxu0 0
        %942 = vmatprep.subr.bf16.mxu0 0
        %943 = vmatpush2.bf16.msra.mxu0 0
        %944 = vmatprep.subr.bf16.mxu0 0
        %945 = vmatpush2.bf16.msra.mxu0 0
        %946 = vmatprep.mubr.bf16.mxu0 0
        %947 = vmatmul.mubr.bf16.gmra.mxu0 %v891
        %v948 = vpop.f32.mrf.mxu0
        %v949 = vadd.f32 %v842, %v948
        %v950 = vpop.f32.mrf.mxu0
        %v951 = vadd.f32 %v846, %v950
        %v952 = vpop.f32.mrf.mxu0
        %v953 = vadd.f32 %v842, %v952
        %v954 = vpop.f32.mrf.mxu0
        %v955 = vadd.f32 %v846, %v954
        %956 = vmatprep.mubr.bf16.mxu0 0
        %957 = vmatmul.mubr.bf16.gmra.mxu0 %v894
        %v958 = vpop.f32.mrf.mxu0
        %v959 = vadd.f32 %v842, %v958
        %v960 = vpop.f32.mrf.mxu0
        %v961 = vadd.f32 %v846, %v960
        %v962 = vpop.f32.mrf.mxu0
        %v963 = vadd.f32 %v842, %v962
        %v964 = vpop.f32.mrf.mxu0
        %v965 = vadd.f32 %v846, %v964
        %966 = vmatprep.mubr.bf16.mxu0 0
        %967 = vmatmul.mubr.bf16.gmra.mxu0 %v897
        %v968 = vpop.f32.mrf.mxu0
        %v969 = vadd.f32 %v842, %v968
        %v970 = vpop.f32.mrf.mxu0
        %v971 = vadd.f32 %v846, %v970
        %v972 = vpop.f32.mrf.mxu0
        %v973 = vadd.f32 %v842, %v972
        %v974 = vpop.f32.mrf.mxu0
        %v975 = vadd.f32 %v846, %v974
        %976 = vmatprep.mubr.bf16.mxu0 0
        %977 = vmatmul.mubr.bf16.gmra.mxu0 %v900
        %v978 = vpop.f32.mrf.mxu0
        %v979 = vadd.f32 %v842, %v978
        %v980 = vpop.f32.mrf.mxu0
        %v981 = vadd.f32 %v846, %v980
        %v982 = vpop.f32.mrf.mxu0
        %v983 = vadd.f32 %v842, %v982
        %v984 = vpop.f32.mrf.mxu0
        %v985 = vadd.f32 %v846, %v984
        %986 = vmatprep.mubr.bf16.mxu0 0
        %987 = vmatmul.mubr.bf16.gmra.mxu0 %v903
        %v988 = vpop.f32.mrf.mxu0
        %v989 = vadd.f32 %v842, %v988
        %v990 = vpop.f32.mrf.mxu0
        %v991 = vadd.f32 %v846, %v990
        %v992 = vpop.f32.mrf.mxu0
        %v993 = vadd.f32 %v842, %v992
        %v994 = vpop.f32.mrf.mxu0
        %v995 = vadd.f32 %v846, %v994
        %996 = vmatprep.mubr.bf16.mxu0 0
        %997 = vmatmul.mubr.bf16.gmra.mxu0 %v906
        %v998 = vpop.f32.mrf.mxu0
        %v999 = vadd.f32 %v842, %v998
        %v1000 = vpop.f32.mrf.mxu0
        %v1001 = vadd.f32 %v846, %v1000
        %v1002 = vpop.f32.mrf.mxu0
        %v1003 = vadd.f32 %v842, %v1002
        %v1004 = vpop.f32.mrf.mxu0
        %v1005 = vadd.f32 %v846, %v1004
        %1006 = vmatprep.mubr.bf16.mxu0 0
        %1007 = vmatmul.mubr.bf16.gmra.mxu0 %v909
        %v1008 = vpop.f32.mrf.mxu0
        %v1009 = vadd.f32 %v842, %v1008
        %v1010 = vpop.f32.mrf.mxu0
        %v1011 = vadd.f32 %v846, %v1010
        %v1012 = vpop.f32.mrf.mxu0
        %v1013 = vadd.f32 %v842, %v1012
        %v1014 = vpop.f32.mrf.mxu0
        %v1015 = vadd.f32 %v846, %v1014
        %1016 = vmatprep.mubr.bf16.mxu0 0
        %1017 = vmatmul.mubr.bf16.gmra.mxu0 %v912
        %v1018 = vpop.f32.mrf.mxu0
        %v1019 = vadd.f32 %v842, %v1018
        %v1020 = vpop.f32.mrf.mxu0
        %v1021 = vadd.f32 %v846, %v1020
        %v1022 = vpop.f32.mrf.mxu0
        %v1023 = vadd.f32 %v842, %v1022
        %v1024 = vpop.f32.mrf.mxu0
        %v1025 = vadd.f32 %v846, %v1024
        %1026 = vdwg.mxu0
        %v1027 = vxor.u32 %v949, 2147483648
        %v1028 = vxor.u32 %v951, 2147483648
        %v1029 = vxor.u32 %v953, 2147483648
        %v1030 = vxor.u32 %v955, 2147483648
        %v1031 = vxor.u32 %v959, 2147483648
        %v1032 = vxor.u32 %v961, 2147483648
        %v1033 = vxor.u32 %v963, 2147483648
        %v1034 = vxor.u32 %v965, 2147483648
        %v1035 = vxor.u32 %v969, 2147483648
        %v1036 = vxor.u32 %v971, 2147483648
        %v1037 = vxor.u32 %v973, 2147483648
        %v1038 = vxor.u32 %v975, 2147483648
        %v1039 = vxor.u32 %v979, 2147483648
        %v1040 = vxor.u32 %v981, 2147483648
        %v1041 = vxor.u32 %v983, 2147483648
        %v1042 = vxor.u32 %v985, 2147483648
        %v1043 = vxor.u32 %v989, 2147483648
        %v1044 = vxor.u32 %v991, 2147483648
        %v1045 = vxor.u32 %v993, 2147483648
        %v1046 = vxor.u32 %v995, 2147483648
        %v1047 = vxor.u32 %v999, 2147483648
        %v1048 = vxor.u32 %v1001, 2147483648
        %v1049 = vxor.u32 %v1003, 2147483648
        %v1050 = vxor.u32 %v1005, 2147483648
        %v1051 = vxor.u32 %v1009, 2147483648
        %v1052 = vxor.u32 %v1011, 2147483648
        %v1053 = vxor.u32 %v1013, 2147483648
        %v1054 = vxor.u32 %v1015, 2147483648
        %v1055 = vxor.u32 %v1019, 2147483648
        %v1056 = vxor.u32 %v1021, 2147483648
        %v1057 = vxor.u32 %v1023, 2147483648
        %v1058 = vxor.u32 %v1025, 2147483648
        %v1059 = vmul.f32 %v1027, 1.442695
        %v1060 = vpow.pop %v1059
        %v1061 = vmul.f32 %v1028, 1.442695
        %v1062 = vpow.pop %v1061
        %v1063 = vmul.f32 %v1029, 1.442695
        %v1064 = vpow.pop %v1063
        %v1065 = vmul.f32 %v1030, 1.442695
        %v1066 = vpow.pop %v1065
        %v1067 = vmul.f32 %v1031, 1.442695
        %v1068 = vpow.pop %v1067
        %v1069 = vmul.f32 %v1032, 1.442695
        %v1070 = vpow.pop %v1069
        %v1071 = vmul.f32 %v1033, 1.442695
        %v1072 = vpow.pop %v1071
        %v1073 = vmul.f32 %v1034, 1.442695
        %v1074 = vpow.pop %v1073
        %v1075 = vmul.f32 %v1035, 1.442695
        %v1076 = vpow.pop %v1075
        %v1077 = vmul.f32 %v1036, 1.442695
        %v1078 = vpow.pop %v1077
        %v1079 = vmul.f32 %v1037, 1.442695
        %v1080 = vpow.pop %v1079
        %v1081 = vmul.f32 %v1038, 1.442695
        %v1082 = vpow.pop %v1081
        %v1083 = vmul.f32 %v1039, 1.442695
        %v1084 = vpow.pop %v1083
        %v1085 = vmul.f32 %v1040, 1.442695
        %v1086 = vpow.pop %v1085
        %v1087 = vmul.f32 %v1041, 1.442695
        %v1088 = vpow.pop %v1087
        %v1089 = vmul.f32 %v1042, 1.442695
        %v1090 = vpow.pop %v1089
        %v1091 = vmul.f32 %v1043, 1.442695
        %v1092 = vpow.pop %v1091
        %v1093 = vmul.f32 %v1044, 1.442695
        %v1094 = vpow.pop %v1093
        %v1095 = vmul.f32 %v1045, 1.442695
        %v1096 = vpow.pop %v1095
        %v1097 = vmul.f32 %v1046, 1.442695
        %v1098 = vpow.pop %v1097
        %v1099 = vmul.f32 %v1047, 1.442695
        %v1100 = vpow.pop %v1099
        %v1101 = vmul.f32 %v1048, 1.442695
        %v1102 = vpow.pop %v1101
        %v1103 = vmul.f32 %v1049, 1.442695
        %v1104 = vpow.pop %v1103
        %v1105 = vmul.f32 %v1050, 1.442695
        %v1106 = vpow.pop %v1105
        %v1107 = vmul.f32 %v1051, 1.442695
        %v1108 = vpow.pop %v1107
        %v1109 = vmul.f32 %v1052, 1.442695
        %v1110 = vpow.pop %v1109
        %v1111 = vmul.f32 %v1053, 1.442695
        %v1112 = vpow.pop %v1111
        %v1113 = vmul.f32 %v1054, 1.442695
        %v1114 = vpow.pop %v1113
        %v1115 = vmul.f32 %v1055, 1.442695
        %v1116 = vpow.pop %v1115
        %v1117 = vmul.f32 %v1056, 1.442695
        %v1118 = vpow.pop %v1117
        %v1119 = vmul.f32 %v1057, 1.442695
        %v1120 = vpow.pop %v1119
        %v1121 = vmul.f32 %v1058, 1.442695
        %v1122 = vpow.pop %v1121
        %v1123 = vadd.f32 %v1060, 1.0
        %v1124 = vadd.f32 %v1062, 1.0
        %v1125 = vadd.f32 %v1064, 1.0
        %v1126 = vadd.f32 %v1066, 1.0
        %v1127 = vadd.f32 %v1068, 1.0
        %v1128 = vadd.f32 %v1070, 1.0
        %v1129 = vadd.f32 %v1072, 1.0
        %v1130 = vadd.f32 %v1074, 1.0
        %v1131 = vadd.f32 %v1076, 1.0
        %v1132 = vadd.f32 %v1078, 1.0
        %v1133 = vadd.f32 %v1080, 1.0
        %v1134 = vadd.f32 %v1082, 1.0
        %v1135 = vadd.f32 %v1084, 1.0
        %v1136 = vadd.f32 %v1086, 1.0
        %v1137 = vadd.f32 %v1088, 1.0
        %v1138 = vadd.f32 %v1090, 1.0
        %v1139 = vadd.f32 %v1092, 1.0
        %v1140 = vadd.f32 %v1094, 1.0
        %v1141 = vadd.f32 %v1096, 1.0
        %v1142 = vadd.f32 %v1098, 1.0
        %v1143 = vadd.f32 %v1100, 1.0
        %v1144 = vadd.f32 %v1102, 1.0
        %v1145 = vadd.f32 %v1104, 1.0
        %v1146 = vadd.f32 %v1106, 1.0
        %v1147 = vadd.f32 %v1108, 1.0
        %v1148 = vadd.f32 %v1110, 1.0
        %v1149 = vadd.f32 %v1112, 1.0
        %v1150 = vadd.f32 %v1114, 1.0
        %v1151 = vadd.f32 %v1116, 1.0
        %v1152 = vadd.f32 %v1118, 1.0
        %v1153 = vadd.f32 %v1120, 1.0
        %v1154 = vadd.f32 %v1122, 1.0
        %v1155 = vrcp.pop %v1123
        %v1156 = vmul.f32 1.0, %v1155
        %v1157 = vrcp.pop %v1124
        %v1158 = vmul.f32 1.0, %v1157
        %v1159 = vrcp.pop %v1125
        %v1160 = vmul.f32 1.0, %v1159
        %v1161 = vrcp.pop %v1126
        %v1162 = vmul.f32 1.0, %v1161
        %v1163 = vrcp.pop %v1127
        %v1164 = vmul.f32 1.0, %v1163
        %v1165 = vrcp.pop %v1128
        %v1166 = vmul.f32 1.0, %v1165
        %v1167 = vrcp.pop %v1129
        %v1168 = vmul.f32 1.0, %v1167
        %v1169 = vrcp.pop %v1130
        %v1170 = vmul.f32 1.0, %v1169
        %v1171 = vrcp.pop %v1131
        %v1172 = vmul.f32 1.0, %v1171
        %v1173 = vrcp.pop %v1132
        %v1174 = vmul.f32 1.0, %v1173
        %v1175 = vrcp.pop %v1133
        %v1176 = vmul.f32 1.0, %v1175
        %v1177 = vrcp.pop %v1134
        %v1178 = vmul.f32 1.0, %v1177
        %v1179 = vrcp.pop %v1135
        %v1180 = vmul.f32 1.0, %v1179
        %v1181 = vrcp.pop %v1136
        %v1182 = vmul.f32 1.0, %v1181
        %v1183 = vrcp.pop %v1137
        %v1184 = vmul.f32 1.0, %v1183
        %v1185 = vrcp.pop %v1138
        %v1186 = vmul.f32 1.0, %v1185
        %v1187 = vrcp.pop %v1139
        %v1188 = vmul.f32 1.0, %v1187
        %v1189 = vrcp.pop %v1140
        %v1190 = vmul.f32 1.0, %v1189
        %v1191 = vrcp.pop %v1141
        %v1192 = vmul.f32 1.0, %v1191
        %v1193 = vrcp.pop %v1142
        %v1194 = vmul.f32 1.0, %v1193
        %v1195 = vrcp.pop %v1143
        %v1196 = vmul.f32 1.0, %v1195
        %v1197 = vrcp.pop %v1144
        %v1198 = vmul.f32 1.0, %v1197
        %v1199 = vrcp.pop %v1145
        %v1200 = vmul.f32 1.0, %v1199
        %v1201 = vrcp.pop %v1146
        %v1202 = vmul.f32 1.0, %v1201
        %v1203 = vrcp.pop %v1147
        %v1204 = vmul.f32 1.0, %v1203
        %v1205 = vrcp.pop %v1148
        %v1206 = vmul.f32 1.0, %v1205
        %v1207 = vrcp.pop %v1149
        %v1208 = vmul.f32 1.0, %v1207
        %v1209 = vrcp.pop %v1150
        %v1210 = vmul.f32 1.0, %v1209
        %v1211 = vrcp.pop %v1151
        %v1212 = vmul.f32 1.0, %v1211
        %v1213 = vrcp.pop %v1152
        %v1214 = vmul.f32 1.0, %v1213
        %v1215 = vrcp.pop %v1153
        %v1216 = vmul.f32 1.0, %v1215
        %v1217 = vrcp.pop %v1154
        %v1218 = vmul.f32 1.0, %v1217
        %v1219 = vpack.c.bf16 %v1160, %v1156
        %v1220 = vpack.c.bf16 %v1162, %v1158
        %v1221 = vpack.c.bf16 %v1168, %v1164
        %v1222 = vpack.c.bf16 %v1170, %v1166
        %v1223 = vpack.c.bf16 %v1176, %v1172
        %v1224 = vpack.c.bf16 %v1178, %v1174
        %v1225 = vpack.c.bf16 %v1184, %v1180
        %v1226 = vpack.c.bf16 %v1186, %v1182
        %v1227 = vpack.c.bf16 %v1192, %v1188
        %v1228 = vpack.c.bf16 %v1194, %v1190
        %v1229 = vpack.c.bf16 %v1200, %v1196
        %v1230 = vpack.c.bf16 %v1202, %v1198
        %v1231 = vpack.c.bf16 %v1208, %v1204
        %v1232 = vpack.c.bf16 %v1210, %v1206
        %v1233 = vpack.c.bf16 %v1216, %v1212
        %v1234 = vpack.c.bf16 %v1218, %v1214
        %v1251 = vunpack.c.l.b16 %v1219
        %v1252 = vunpack.c.l.b16 %v1220
        %v1253 = vunpack.c.h.b16 %v1219
        %v1254 = vunpack.c.h.b16 %v1220
        %v1255 = vunpack.c.l.b16 %v1221
        %v1256 = vunpack.c.l.b16 %v1222
        %v1257 = vunpack.c.h.b16 %v1221
        %v1258 = vunpack.c.h.b16 %v1222
        %v1259 = vunpack.c.l.b16 %v1223
        %v1260 = vunpack.c.l.b16 %v1224
        %v1261 = vunpack.c.h.b16 %v1223
        %v1262 = vunpack.c.h.b16 %v1224
        %v1263 = vunpack.c.l.b16 %v1225
        %v1264 = vunpack.c.l.b16 %v1226
        %v1265 = vunpack.c.h.b16 %v1225
        %v1266 = vunpack.c.h.b16 %v1226
        %v1267 = vunpack.c.l.b16 %v1227
        %v1268 = vunpack.c.l.b16 %v1228
        %v1269 = vunpack.c.h.b16 %v1227
        %v1270 = vunpack.c.h.b16 %v1228
        %v1271 = vunpack.c.l.b16 %v1229
        %v1272 = vunpack.c.l.b16 %v1230
        %v1273 = vunpack.c.h.b16 %v1229
        %v1274 = vunpack.c.h.b16 %v1230
        %v1275 = vunpack.c.l.b16 %v1231
        %v1276 = vunpack.c.l.b16 %v1232
        %v1277 = vunpack.c.h.b16 %v1231
        %v1278 = vunpack.c.h.b16 %v1232
        %v1279 = vunpack.c.l.b16 %v1233
        %v1280 = vunpack.c.l.b16 %v1234
        %v1281 = vunpack.c.h.b16 %v1233
        %v1282 = vunpack.c.h.b16 %v1234
        %v1283 = vpack.c.b16 %v1252, %v1251
        %v1284 = vpack.c.b16 %v1254, %v1253
        %v1285 = vpack.c.b16 %v1256, %v1255
        %v1286 = vpack.c.b16 %v1258, %v1257
        %v1287 = vpack.c.b16 %v1260, %v1259
        %v1288 = vpack.c.b16 %v1262, %v1261
        %v1289 = vpack.c.b16 %v1264, %v1263
        %v1290 = vpack.c.b16 %v1266, %v1265
        %v1291 = vpack.c.b16 %v1268, %v1267
        %v1292 = vpack.c.b16 %v1270, %v1269
        %v1293 = vpack.c.b16 %v1272, %v1271
        %v1294 = vpack.c.b16 %v1274, %v1273
        %v1295 = vpack.c.b16 %v1276, %v1275
        %v1296 = vpack.c.b16 %v1278, %v1277
        %v1297 = vpack.c.b16 %v1280, %v1279
        %v1298 = vpack.c.b16 %v1282, %v1281
        %1315 = vst [vmem:[%s319] sm:$0xff] %v1283
        %1316 = vst [vmem:[%s319 + $0x8] sm:$0xff] %v1284
        %1317 = vst [vmem:[%s319 + $0x10] sm:$0xff] %v1285
        %1318 = vst [vmem:[%s319 + $0x18] sm:$0xff] %v1286
        %1319 = vst [vmem:[%s319 + $0x20] sm:$0xff] %v1287
        %1320 = vst [vmem:[%s319 + $0x28] sm:$0xff] %v1288
        %1321 = vst [vmem:[%s319 + $0x30] sm:$0xff] %v1289
        %1322 = vst [vmem:[%s319 + $0x38] sm:$0xff] %v1290
        %1323 = vst [vmem:[%s319 + $0x40] sm:$0xff] %v1291
        %1324 = vst [vmem:[%s319 + $0x48] sm:$0xff] %v1292
        %1325 = vst [vmem:[%s319 + $0x50] sm:$0xff] %v1293
        %1326 = vst [vmem:[%s319 + $0x58] sm:$0xff] %v1294
        %1327 = vst [vmem:[%s319 + $0x60] sm:$0xff] %v1295
        %1328 = vst [vmem:[%s319 + $0x68] sm:$0xff] %v1296
        %1329 = vst [vmem:[%s319 + $0x70] sm:$0xff] %v1297
        %1330 = vst [vmem:[%s319 + $0x78] sm:$0xff] %v1298
        %s1331 = sand.u32 %s185, 1
        %s1332 = scalar_lea.sflag [#allocation4], %s1331
        %s1333 = sand.u32 %s185, 1
        %s1334 = smul.addr %s1333, 128
        %s1335 = scalar_lea.vmem [#allocation7], %s1334
        // Predicated region
        $region57: #{tpu_custom_call.1} parent=47 // pred_check
          %p1336 = pneg %p195
        $region58: #{tpu_custom_call.1} parent=47 // pred_check_branch
          %1338 = sbr.rel (%p1336) target = $region60
        $region59: #{tpu_custom_call.1} parent=47 // pred_region
          %s1339 = smul.u32 16, %s25
          %s1340 = ssub.s32 25, %s1339
          %p1341 = scmp.lt.s32.totalorder %s1340, 16
          %s1342 = scalar_select %p1341, %s1340, 16
          %s1343 = smul.u32 64, %s1342
          %s1344 = smul.u32 %s1343, 2
          %s1346 = ssub.s32 2048, %s1344
          %1347 = vsyncadd %s1332, %s1346
          %p1348 = scmp.ne.s32.totalorder 0, %s1344
          %s1349 = smul.addr %s1339, 2
          %s1350 = smul.addr %s1349, 64
          %s1351 = scalar_lea.hbm %s7, %s1350
          %s1352 = smul.u32 8, %s1342
          %s1353 = sshll.u32 %s1335, 4
          %s1354 = int_to_ptr.vmem [resolvable:$true] %s1353
          %s1355 = sshll.u32 %s1352, 4
          %1359 = dma.vmem_to_hbm [thread:$0]  (%p1348), %s1354, %s1355, %s1351, %s1332, 128, 128, 8
        $region60: #{tpu_custom_call.1} parent=47 // pred_fallthru
          _
      $region48: #{tpu_custom_call.1} parent=5 // pred_fallthru
        _
      %p1360 = scmp.le.s32.totalorder 2, %s20
      // Predicated region
      $region61: #{tpu_custom_call.1} parent=5 // pred_check
        %p1361 = pneg %p1360
      $region62: #{tpu_custom_call.1} parent=5 // pred_check_branch
        %1363 = sbr.rel (%p1361) target = $region64
      $region63: #{tpu_custom_call.1} parent=5 // pred_region
        %s1364 = ssub.s32 %s20, 2
        // Predicated region
        $region65: #{tpu_custom_call.1} parent=63 // pred_check
          %p1365 = pneg %p201
        $region66: #{tpu_custom_call.1} parent=63 // pred_check_branch
          %1367 = sbr.rel (%p1365) target = $region68
        $region67: #{tpu_custom_call.1} parent=63 // pred_region
          %s1368 = sand.u32 %s186, 1
          %s1369 = scalar_lea.sflag [#allocation4], %s1368
          %s1370 = sand.u32 %s186, 1
          %s1371 = smul.addr %s1370, 128
          %s1372 = scalar_lea.vmem [#allocation7], %s1371
          %1373 = dma.done %s1369, 2048
        $region68: #{tpu_custom_call.1} parent=63 // pred_fallthru
          _
      $region64: #{tpu_custom_call.1} parent=5 // pred_fallthru
        _
    $region6: #{tpu_custom_call.1} parent=1 // loop_footer
      %s24 = sadd.s32 1, %s20
    $region7: #{tpu_custom_call.1} parent=1 // loop_footer_branch
      %19 = sbr.rel target = $region3
    $region8: #{tpu_custom_call.1} parent=1 // loop_exit
      _
    %1374 = vsyncpa [#allocation3], 1
    %s1375 = scalar_lea.sflag [#allocation3], 1
    %1376 = vsyncpa %s1375, 1
    %1377 = vsyncpa [#allocation6], 1
    %1378 = vsyncpa [#allocation4], 1
    %s1379 = scalar_lea.sflag [#allocation4], 1
    %1380 = vsyncpa %s1379, 1

</llo_original>
